<compile_context>
chip_gen: v7x
topology: tpu7x:2x2x1
jax: 0.10.0
libtpu: 0.0.40
codegen_flags: <defaults>
</compile_context>

<pallas_src>
import math
from functools import partial

import jax
import jax.numpy as jnp
from jax.experimental import pallas as pl
from jax.experimental.pallas import tpu as pltpu


_TP_MAX = 1024                     # max P-tile rows (multiple of 128)
_VMEM_LIMIT = 32 * 1024 * 1024     # explicit, safe on v5e/v6e/v7x (64 MiB floor)


def _round_up(x, m):
    return (x + m - 1) // m * m


def _choose_tp(P):
    """Tile rows: <= _TP_MAX, multiple of 128, >= 2 P-tiles when P allows
    (keeps both v7x TensorCores busy) while minimizing padding waste."""
    n_tiles = max(-(-P // _TP_MAX), 2 if P > 128 else 1)
    return _round_up(-(-P // n_tiles), 128)


def _pad_axis(a, target, axis):
    pad = target - a.shape[axis]
    if pad == 0:
        return a
    widths = [(0, 0)] * a.ndim
    widths[axis] = (0, pad)
    return jnp.pad(a, widths)


# --------------------------------------------------------------------------- #
# Pallas kernels
# --------------------------------------------------------------------------- #
def _mlp_head_kernel(num_experts, fea_ref, coor_ref, w1c_ref, w1f_ref, b1_ref,
                     w2_ref, b2_ref, wh_ref, bh_ref, head_ref):
    """body (1x1 conv->ReLU->1x1 conv->ReLU) + fused routing|offset head.

    fea_ref:  (1, TP, C)   bf16  bilinearly upsampled input features
    coor_ref: (TP, 4)      f32   relative-coordinate features (batch invariant)
    head_ref: (1, TP, E+2) f32   [sigmoid(routing) | offset]
    """
    fea = fea_ref[0]
    h = (jnp.dot(fea, w1f_ref[...], preferred_element_type=jnp.float32)
         + jnp.dot(coor_ref[...], w1c_ref[...], preferred_element_type=jnp.float32)
         + b1_ref[...])
    h = jnp.maximum(h, 0.0).astype(jnp.bfloat16)           # ReLU in f32, matmul in bf16
    h = jnp.dot(h, w2_ref[...], preferred_element_type=jnp.float32) + b2_ref[...]
    h = jnp.maximum(h, 0.0).astype(jnp.bfloat16)
    head = jnp.dot(h, wh_ref[...], preferred_element_type=jnp.float32) + bh_ref[...]
    # sigmoid on the first E lanes only: EUP sigmoid over all E+2 lanes plus a
    # single VPU select — no lane concat / relayout.
    lane = jax.lax.broadcasted_iota(jnp.int32, head.shape, 1)
    head_ref[0] = jnp.where(lane < num_experts, jax.nn.sigmoid(head), head)


def _moe_kernel(num_experts, fea_ref, head_ref, wc_ref, we_ref, rep_ref,
                mix_ref, out_ref):
    """Per-pixel mixture-of-experts compress/expand + residual.

    PyTorch mixes weights per pixel:
        out = (sum_e r_e We_e) @ ((sum_e r_e Wc_e) @ fea) + fea
    Stacked, shared-weight, MXU-friendly form:
        cmp     = fea @ [Wc_0^T | ... | Wc_{E-1}^T]                 (TP, E*c8)
        r_rep   = r @ rep_mat        # r_e replicated c8 times      (TP, E*c8)
        mid_all = r_rep * ((r_rep * cmp) @ mix_mat)                 (TP, E*c8)
        out     = mid_all @ [We_0^T; ...; We_{E-1}^T] + fea
    rep_mat / mix_mat are tiny constant 0/1 matrices, so replicate / per-expert
    slab-sum / tile all run on the MXU instead of E lane slices + concats.
    """
    fea = fea_ref[0]                                       # (TP, C) bf16
    r = head_ref[0][:, :num_experts]                       # (TP, E) f32 routing
    cmp = jnp.dot(fea, wc_ref[...], preferred_element_type=jnp.float32)    # (TP,E*c8)
    r_rep = jnp.dot(r, rep_ref[...], preferred_element_type=jnp.float32)   # (TP,E*c8)
    mid_all = r_rep * jnp.dot(r_rep * cmp, mix_ref[...],
                              preferred_element_type=jnp.float32)          # (TP,E*c8)
    out = fea.astype(jnp.float32) + jnp.dot(
        mid_all.astype(jnp.bfloat16), we_ref[...],
        preferred_element_type=jnp.float32)                # f32 accumulate + residual
    out_ref[0] = out.T.astype(out_ref.dtype)               # (C, TP) lane-dense bf16


# --------------------------------------------------------------------------- #
# pallas_call wrappers
# --------------------------------------------------------------------------- #
def _run_mlp_head(pre_fea, coor_feat, w1_coor, w1_fea, b1, w2, b2, wh, bh,
                  num_experts, tp):
    B, P_pad, C = pre_fea.shape
    HW = wh.shape[1]                                       # = num_experts + 2
    return pl.pallas_call(
        partial(_mlp_head_kernel, num_experts),
        out_shape=jax.ShapeDtypeStruct((B, P_pad, HW), jnp.float32),
        grid=(P_pad // tp, B),                 # B innermost: coor tile stays resident
        in_specs=[pl.BlockSpec((1, tp, C), lambda p, b: (b, p, 0)),
                  pl.BlockSpec((tp, 4), lambda p, b: (p, 0)),
                  pl.BlockSpec((4, C), lambda p, b: (0, 0)),   # weights: constant index
                  pl.BlockSpec((C, C), lambda p, b: (0, 0)),   #  -> stay VMEM resident
                  pl.BlockSpec((1, C), lambda p, b: (0, 0)),
                  pl.BlockSpec((C, C), lambda p, b: (0, 0)),
                  pl.BlockSpec((1, C), lambda p, b: (0, 0)),
                  pl.BlockSpec((C, HW), lambda p, b: (0, 0)),
                  pl.BlockSpec((1, HW), lambda p, b: (0, 0))],
        out_specs=pl.BlockSpec((1, tp, HW), lambda p, b: (b, p, 0)),
        compiler_params=pltpu.CompilerParams(
            dimension_semantics=("parallel", "parallel"),
            vmem_limit_bytes=_VMEM_LIMIT),
    )(pre_fea, coor_feat, w1_coor, w1_fea, b1, w2, b2, wh, bh)


def _run_moe(fea0, head, wc_all, we_all, rep_mat, mix_mat, num_experts, tp):
    B, P_pad, C = fea0.shape
    HW = head.shape[2]
    E = num_experts
    Ec8 = wc_all.shape[1]
    return pl.pallas_call(
        partial(_moe_kernel, num_experts),
        out_shape=jax.ShapeDtypeStruct((B, C, P_pad), jnp.bfloat16),
        grid=(P_pad // tp, B),
        in_specs=[pl.BlockSpec((1, tp, C), lambda p, b: (b, p, 0)),
                  pl.BlockSpec((1, tp, HW), lambda p, b: (b, p, 0)),
                  pl.BlockSpec((C, Ec8), lambda p, b: (0, 0)),
                  pl.BlockSpec((Ec8, C), lambda p, b: (0, 0)),
                  pl.BlockSpec((E, Ec8), lambda p, b: (0, 0)),
                  pl.BlockSpec((Ec8, Ec8), lambda p, b: (0, 0))],
        out_specs=pl.BlockSpec((1, C, tp), lambda p, b: (b, 0, p)),
        compiler_params=pltpu.CompilerParams(
            dimension_semantics=("parallel", "parallel"),
            vmem_limit_bytes=_VMEM_LIMIT),
    )(fea0, head, wc_all, we_all, rep_mat, mix_mat)


# --------------------------------------------------------------------------- #
# grid_sample pieces (plain JAX glue)
# --------------------------------------------------------------------------- #
def _interp_matrix(out_len, in_len, scale):
    """1-D bilinear interpolation matrix (out_len, in_len) matching the module:
    grid built with the (o+0.5)/scale-0.5 then *2/(L-1)-1 convention, sampled
    by F.grid_sample(padding_mode='zeros', align_corners=False)."""
    o = jnp.arange(out_len, dtype=jnp.float32)
    pix = (o + 0.5) / scale - 0.5
    g = pix * 2.0 / (in_len - 1) - 1.0
    src = ((g + 1.0) * in_len - 1.0) * 0.5          # align_corners=False unnormalize
    i0 = jnp.floor(src)
    w1 = src - i0
    w0 = 1.0 - w1

    def tap(idx, w):
        valid = (idx >= 0) & (idx <= in_len - 1)
        idxc = jnp.clip(idx, 0, in_len - 1).astype(jnp.int32)
        return (w * valid.astype(jnp.float32))[:, None] * jax.nn.one_hot(
            idxc, in_len, dtype=jnp.float32)

    return tap(i0, w0) + tap(i0 + 1.0, w1)


def _bilinear_grid_sample(x, gx, gy):
    """F.grid_sample(mode='bilinear', padding_mode='zeros', align_corners=False).

    x: (B, H, W, C) NHWC; gx, gy: (B, outH, outW) normalized coords in [-1, 1].
    """
    # TODO(synk): data-dependent bilinear gather has no clean BlockSpec expression;
    # kept in plain JAX rather than faking it inside the kernel.
    B, H, W, C = x.shape
    ix = ((gx + 1.0) * W - 1.0) * 0.5
    iy = ((gy + 1.0) * H - 1.0) * 0.5
    ix0 = jnp.floor(ix)
    iy0 = jnp.floor(iy)
    wx1 = ix - ix0
    wx0 = 1.0 - wx1
    wy1 = iy - iy0
    wy0 = 1.0 - wy1
    bidx = jnp.arange(B)[:, None, None]

    def tap(iyf, ixf, wgt):
        valid = (ixf >= 0) & (ixf <= W - 1) & (iyf >= 0) & (iyf <= H - 1)
        ixi = jnp.clip(ixf, 0, W - 1).astype(jnp.int32)
        iyi = jnp.clip(iyf, 0, H - 1).astype(jnp.int32)
        vals = x[bidx, iyi, ixi]                                    # (B, outH, outW, C)
        return vals * (wgt * valid.astype(jnp.float32))[..., None]

    return (tap(iy0, ix0, wy0 * wx0) + tap(iy0, ix0 + 1.0, wy0 * wx1)
            + tap(iy0 + 1.0, ix0, wy1 * wx0) + tap(iy0 + 1.0, ix0 + 1.0, wy1 * wx1))


# --------------------------------------------------------------------------- #
# Parameters (deterministic synthetic init mirroring the module's shapes,
# pre-packed / pre-transposed / pre-cast once for the kernels)
# --------------------------------------------------------------------------- #
def init_params(key, channels, num_experts):
    c8 = channels // 8
    ks = jax.random.split(key, 10)

    def unif(k, shape, fan_in):
        bound = 1.0 / math.sqrt(fan_in)
        return jax.random.uniform(k, shape, jnp.float32, -bound, bound)

    # body conv1: Conv2d(C+4, C, 1) split into coordinate part (4,C) + feature part (C,C)
    w1_coor = unif(ks[0], (4, channels), channels + 4)
    w1_fea = unif(ks[1], (channels, channels), channels + 4)
    b1 = unif(ks[2], (1, channels), channels + 4)
    # body conv2: Conv2d(C, C, 1)
    w2 = unif(ks[3], (channels, channels), channels)
    b2 = unif(ks[4], (1, channels), channels)
    # routing Conv2d(C, E, 1) and offset Conv2d(C, 2, 1) merged into one head
    wr = unif(ks[5], (channels, num_experts), channels)
    br = unif(ks[6], (1, num_experts), channels)
    wo = unif(ks[7], (channels, 2), channels)
    bo = unif(ks[8], (1, 2), channels)
    # weight_compress: (E, C//8, C, 1, 1); weight_expand: (E, C, C//8, 1, 1)
    kc, ke = jax.random.split(ks[9])
    wc = unif(kc, (num_experts, c8, channels), channels)            # (E, c8, C)
    we = unif(ke, (num_experts, channels, c8), c8)                  # (E, C, c8)
    # stacked transposed expert weights:
    #   wc_all[:, e*c8:(e+1)*c8] = Wc_e^T ; we_all[e*c8:(e+1)*c8, :] = We_e^T
    wc_all = jnp.transpose(wc, (2, 0, 1)).reshape(channels, num_experts * c8)
    we_all = jnp.transpose(we, (0, 2, 1)).reshape(num_experts * c8, channels)

    return dict(
        w1_coor=w1_coor, b1=b1,                                     # f32 (tiny K=4 matmul)
        w1_fea=w1_fea.astype(jnp.bfloat16),
        w2=w2.astype(jnp.bfloat16), b2=b2,
        wh=jnp.concatenate([wr, wo], axis=1).astype(jnp.bfloat16),  # (C, E+2)
        bh=jnp.concatenate([br, bo], axis=1),                       # (1, E+2) f32
        wc_all=wc_all.astype(jnp.bfloat16),
        we_all=we_all.astype(jnp.bfloat16),
    )


# --------------------------------------------------------------------------- #
# Forward pass (matches SCAB_upsample.forward)
# --------------------------------------------------------------------------- #
@partial(jax.jit, static_argnums=(2, 3, 4))
def scab_upsample_forward(x_nchw, params, scale, outH, outW):
    B, C, H, W = x_nchw.shape
    x = jnp.transpose(x_nchw, (0, 2, 3, 1)).astype(jnp.float32)     # NHWC
    P = outH * outW
    num_experts = params["wh"].shape[1] - 2
    c8 = C // 8

    tp = _choose_tp(P)
    P_pad = _round_up(P, tp)

    # 4-channel relative-coordinate features: [1/scale, 1/scale, coor_h, coor_w]
    i = jnp.arange(outH, dtype=jnp.float32)
    j = jnp.arange(outW, dtype=jnp.float32)
    coor_h = (i + 0.5) / scale - jnp.floor((i + 0.5) / scale + 1e-3) - 0.5
    coor_w = (j + 0.5) / scale - jnp.floor((j + 0.5) / scale + 1e-3) - 0.5
    ones = jnp.full((outH, outW), 1.0 / scale, jnp.float32)
    coor_feat = jnp.stack(
        [ones, ones,
         jnp.broadcast_to(coor_h[:, None], (outH, outW)),
         jnp.broadcast_to(coor_w[None, :], (outH, outW))], axis=-1).reshape(P, 4)
    coor_feat = _pad_axis(coor_feat, P_pad, 0)                      # (P_pad, 4) f32

    # pre_fea = grid_sample(x, None, ...): static separable grid -> two dense
    # interpolation matmuls instead of an XLA gather.
    Ry = _interp_matrix(outH, H, scale)                             # (outH, H)
    Cx = _interp_matrix(outW, W, scale)                             # (outW, W)
    pre_fea = jnp.einsum('oy,px,byxc->bopc', Ry, Cx, x)             # (B,outH,outW,C) f32
    pre_fea = _pad_axis(pre_fea.reshape(B, P, C).astype(jnp.bfloat16), P_pad, 1)

    # Pallas kernel 1: body + fused routing/offset head -> (B, P_pad, E+2) f32
    head = _run_mlp_head(pre_fea, coor_feat, params["w1_coor"], params["w1_fea"],
                         params["b1"], params["w2"], params["b2"],
                         params["wh"], params["bh"], num_experts, tp)

    # fea0 = grid_sample(x, offset, ...)   (data-dependent gather stays in JAX)
    gx0 = ((j + 0.5) / scale - 0.5) * 2.0 / (W - 1) - 1.0
    gy0 = ((i + 0.5) / scale - 0.5) * 2.0 / (H - 1) - 1.0
    gx_base = jnp.broadcast_to(gx0[None, None, :], (B, outH, outW))
    gy_base = jnp.broadcast_to(gy0[None, :, None], (B, outH, outW))
    off = head[:, :P, num_experts:].reshape(B, outH, outW, 2)
    gx = gx_base + off[..., 0] * 2.0 / (W - 1)
    gy = gy_base + off[..., 1] * 2.0 / (H - 1)
    fea0 = _bilinear_grid_sample(x, gx, gy)                         # (B,outH,outW,C) f32
    fea0 = _pad_axis(fea0.reshape(B, P, C).astype(jnp.bfloat16), P_pad, 1)

    # constant 0/1 structure matrices for the expert mixing (see _moe_kernel)
    rep_mat = jnp.repeat(jnp.eye(num_experts, dtype=jnp.float32), c8, axis=1)
    mix_mat = jnp.tile(jnp.eye(c8, dtype=jnp.float32), (num_experts, num_experts))

    # Pallas kernel 2: routed expert compress/expand + residual, NCHW-layout output
    out = _run_moe(fea0, head, params["wc_all"], params["we_all"],
                   rep_mat, mix_mat, num_experts, tp)
    return out[:, :, :P].reshape(B, C, outH, outW)                  # NCHW bf16


# --------------------------------------------------------------------------- #
if __name__ == "__main__":
    key = jax.random.PRNGKey(0)
    kx, kp = jax.random.split(key)

    B, C, H, W = 2, 32, 8, 8          # channels must be divisible by 8
    num_experts = 4
    scale = 1.5
    outH, outW = math.ceil(scale * H), math.ceil(scale * W)

    x = jax.random.normal(kx, (B, C, H, W), jnp.float32)
    params = init_params(kp, C, num_experts)

    out = scab_upsample_forward(x, params, scale, outH, outW)
    out = jax.block_until_ready(out)

    assert out.shape == (B, C, outH, outW), out.shape
    assert bool(jnp.all(jnp.isfinite(out.astype(jnp.float32))))
    print("KERNEL_OK")
</pallas_src>

<mosaic_0001>
module attributes {stable_mosaic.version = 11 : i64} {
  func.func @_mlp_head_kernel(%arg0: i32, %arg1: i32, %arg2: memref<1x128x32xbf16, #tpu.memory_space<vmem>>, %arg3: memref<128x4xf32, #tpu.memory_space<vmem>>, %arg4: memref<4x32xf32, #tpu.memory_space<vmem>>, %arg5: memref<32x32xbf16, #tpu.memory_space<vmem>>, %arg6: memref<1x32xf32, #tpu.memory_space<vmem>>, %arg7: memref<32x32xbf16, #tpu.memory_space<vmem>>, %arg8: memref<1x32xf32, #tpu.memory_space<vmem>>, %arg9: memref<32x6xbf16, #tpu.memory_space<vmem>>, %arg10: memref<1x6xf32, #tpu.memory_space<vmem>>, %arg11: memref<1x128x6xf32, #tpu.memory_space<vmem>>) attributes {dimension_semantics = [#tpu.dimension_semantics<parallel>, #tpu.dimension_semantics<parallel>], iteration_bounds = array<i64: 2, 2>, scalar_prefetch = 0 : i64, scratch_operands = 0 : i64, tpu.core_type = #tpu.core_type<tc>, window_params = [{transform_indices = @transform_0, window_bounds = array<i64: 1, 128, 32>}, {transform_indices = @transform_1, window_bounds = array<i64: 128, 4>}, {pipeline_mode = #tpu.pipeline_mode<synchronous>, transform_indices = @transform_2, window_bounds = array<i64: 4, 32>}, {pipeline_mode = #tpu.pipeline_mode<synchronous>, transform_indices = @transform_3, window_bounds = array<i64: 32, 32>}, {pipeline_mode = #tpu.pipeline_mode<synchronous>, transform_indices = @transform_4, window_bounds = array<i64: 1, 32>}, {pipeline_mode = #tpu.pipeline_mode<synchronous>, transform_indices = @transform_5, window_bounds = array<i64: 32, 32>}, {pipeline_mode = #tpu.pipeline_mode<synchronous>, transform_indices = @transform_6, window_bounds = array<i64: 1, 32>}, {pipeline_mode = #tpu.pipeline_mode<synchronous>, transform_indices = @transform_7, window_bounds = array<i64: 32, 6>}, {pipeline_mode = #tpu.pipeline_mode<synchronous>, transform_indices = @transform_8, window_bounds = array<i64: 1, 6>}, {transform_indices = @transform_9, window_bounds = array<i64: 1, 128, 6>}]} {
    %c0 = arith.constant 0 : index
    %c0_0 = arith.constant 0 : index
    %c0_1 = arith.constant 0 : index
    %0 = vector.load %arg2[%c0, %c0_0, %c0_1] : memref<1x128x32xbf16, #tpu.memory_space<vmem>>, vector<1x128x32xbf16>
    %1 = vector.shape_cast %0 : vector<1x128x32xbf16> to vector<128x32xbf16>
    %c0_2 = arith.constant 0 : index
    %c0_3 = arith.constant 0 : index
    %2 = vector.load %arg5[%c0_2, %c0_3] : memref<32x32xbf16, #tpu.memory_space<vmem>>, vector<32x32xbf16>
    %cst = arith.constant dense<0.000000e+00> : vector<128x32xf32>
    %3 = tpu.matmul %1, %2, %cst {dimension_numbers = #tpu.dot_dimension_numbers<[1], [0], [0], [1], [0, 0, 1, 1], [], []>} : vector<128x32xbf16>, vector<32x32xbf16>, vector<128x32xf32> -> vector<128x32xf32>
    %c0_4 = arith.constant 0 : index
    %c0_5 = arith.constant 0 : index
    %4 = vector.load %arg3[%c0_4, %c0_5] : memref<128x4xf32, #tpu.memory_space<vmem>>, vector<128x4xf32>
    %c0_6 = arith.constant 0 : index
    %c0_7 = arith.constant 0 : index
    %5 = vector.load %arg4[%c0_6, %c0_7] : memref<4x32xf32, #tpu.memory_space<vmem>>, vector<4x32xf32>
    %cst_8 = arith.constant dense<0.000000e+00> : vector<128x32xf32>
    %6 = tpu.matmul %4, %5, %cst_8 {dimension_numbers = #tpu.dot_dimension_numbers<[1], [0], [0], [1], [0, 0, 1, 1], [], []>} : vector<128x4xf32>, vector<4x32xf32>, vector<128x32xf32> -> vector<128x32xf32>
    %7 = arith.addf %3, %6 : vector<128x32xf32>
    %c0_9 = arith.constant 0 : index
    %c0_10 = arith.constant 0 : index
    %8 = vector.load %arg6[%c0_9, %c0_10] : memref<1x32xf32, #tpu.memory_space<vmem>>, vector<1x32xf32>
    %9 = vector.broadcast %8 : vector<1x32xf32> to vector<128x32xf32>
    %10 = arith.addf %7, %9 : vector<128x32xf32>
    %cst_11 = arith.constant 0.000000e+00 : f32
    %11 = vector.broadcast %cst_11 : f32 to vector<128x32xf32>
    %12 = arith.maximumf %10, %11 : vector<128x32xf32>
    %13 = arith.truncf %12 : vector<128x32xf32> to vector<128x32xbf16>
    %c0_12 = arith.constant 0 : index
    %c0_13 = arith.constant 0 : index
    %14 = vector.load %arg7[%c0_12, %c0_13] : memref<32x32xbf16, #tpu.memory_space<vmem>>, vector<32x32xbf16>
    %cst_14 = arith.constant dense<0.000000e+00> : vector<128x32xf32>
    %15 = tpu.matmul %13, %14, %cst_14 {dimension_numbers = #tpu.dot_dimension_numbers<[1], [0], [0], [1], [0, 0, 1, 1], [], []>} : vector<128x32xbf16>, vector<32x32xbf16>, vector<128x32xf32> -> vector<128x32xf32>
    %c0_15 = arith.constant 0 : index
    %c0_16 = arith.constant 0 : index
    %16 = vector.load %arg8[%c0_15, %c0_16] : memref<1x32xf32, #tpu.memory_space<vmem>>, vector<1x32xf32>
    %17 = vector.broadcast %16 : vector<1x32xf32> to vector<128x32xf32>
    %18 = arith.addf %15, %17 : vector<128x32xf32>
    %cst_17 = arith.constant 0.000000e+00 : f32
    %19 = vector.broadcast %cst_17 : f32 to vector<128x32xf32>
    %20 = arith.maximumf %18, %19 : vector<128x32xf32>
    %21 = arith.truncf %20 : vector<128x32xf32> to vector<128x32xbf16>
    %c0_18 = arith.constant 0 : index
    %c0_19 = arith.constant 0 : index
    %22 = vector.load %arg9[%c0_18, %c0_19] : memref<32x6xbf16, #tpu.memory_space<vmem>>, vector<32x6xbf16>
    %cst_20 = arith.constant dense<0.000000e+00> : vector<128x6xf32>
    %23 = tpu.matmul %21, %22, %cst_20 {dimension_numbers = #tpu.dot_dimension_numbers<[1], [0], [0], [1], [0, 0, 1, 1], [], []>} : vector<128x32xbf16>, vector<32x6xbf16>, vector<128x6xf32> -> vector<128x6xf32>
    %c0_21 = arith.constant 0 : index
    %c0_22 = arith.constant 0 : index
    %24 = vector.load %arg10[%c0_21, %c0_22] : memref<1x6xf32, #tpu.memory_space<vmem>>, vector<1x6xf32>
    %25 = vector.broadcast %24 : vector<1x6xf32> to vector<128x6xf32>
    %26 = arith.addf %23, %25 : vector<128x6xf32>
    %27 = tpu.iota {dimensions = array<i32: 1>} : vector<128x6xi32>
    %c4_i32 = arith.constant 4 : i32
    %28 = vector.broadcast %c4_i32 : i32 to vector<128x6xi32>
    %29 = arith.cmpi slt, %27, %28 : vector<128x6xi32>
    %30 = arith.negf %26 : vector<128x6xf32>
    %31 = math.exp %30 : vector<128x6xf32>
    %cst_23 = arith.constant 1.000000e+00 : f32
    %32 = vector.broadcast %cst_23 : f32 to vector<128x6xf32>
    %33 = arith.addf %32, %31 : vector<128x6xf32>
    %34 = arith.divf %32, %33 : vector<128x6xf32>
    %35 = arith.select %29, %34, %26 : vector<128x6xi1>, vector<128x6xf32>
    %c0_24 = arith.constant 0 : index
    %c0_25 = arith.constant 0 : index
    %c0_26 = arith.constant 0 : index
    %36 = vector.load %arg11[%c0_24, %c0_25, %c0_26] : memref<1x128x6xf32, #tpu.memory_space<vmem>>, vector<1x128x6xf32>
    %37 = vector.shape_cast %36 : vector<1x128x6xf32> to vector<128x6xf32>
    %38 = vector.shape_cast %35 : vector<128x6xf32> to vector<1x128x6xf32>
    tpu.vector_store %arg11[%c0_24, %c0_25, %c0_26], %38 {strides = array<i32>} : memref<1x128x6xf32, #tpu.memory_space<vmem>>, vector<1x128x6xf32>,
    return
  }
  func.func @transform_0(%arg0: i32, %arg1: i32) -> (i32, i32, i32) {
    %c0_i32 = arith.constant 0 : i32
    %c0_i32_0 = arith.constant 0 : i32
    return %arg1, %arg0, %c0_i32 : i32, i32, i32
  }
  func.func @transform_1(%arg0: i32, %arg1: i32) -> (i32, i32) {
    %c0_i32 = arith.constant 0 : i32
    %c0_i32_0 = arith.constant 0 : i32
    return %arg0, %c0_i32 : i32, i32
  }
  func.func @transform_2(%arg0: i32, %arg1: i32) -> (i32, i32) {
    %c0_i32 = arith.constant 0 : i32
    %c0_i32_0 = arith.constant 0 : i32
    %c0_i32_1 = arith.constant 0 : i32
    return %c0_i32, %c0_i32_0 : i32, i32
  }
  func.func @transform_3(%arg0: i32, %arg1: i32) -> (i32, i32) {
    %c0_i32 = arith.constant 0 : i32
    %c0_i32_0 = arith.constant 0 : i32
    %c0_i32_1 = arith.constant 0 : i32
    return %c0_i32, %c0_i32_0 : i32, i32
  }
  func.func @transform_4(%arg0: i32, %arg1: i32) -> (i32, i32) {
    %c0_i32 = arith.constant 0 : i32
    %c0_i32_0 = arith.constant 0 : i32
    %c0_i32_1 = arith.constant 0 : i32
    return %c0_i32, %c0_i32_0 : i32, i32
  }
  func.func @transform_5(%arg0: i32, %arg1: i32) -> (i32, i32) {
    %c0_i32 = arith.constant 0 : i32
    %c0_i32_0 = arith.constant 0 : i32
    %c0_i32_1 = arith.constant 0 : i32
    return %c0_i32, %c0_i32_0 : i32, i32
  }
  func.func @transform_6(%arg0: i32, %arg1: i32) -> (i32, i32) {
    %c0_i32 = arith.constant 0 : i32
    %c0_i32_0 = arith.constant 0 : i32
    %c0_i32_1 = arith.constant 0 : i32
    return %c0_i32, %c0_i32_0 : i32, i32
  }
  func.func @transform_7(%arg0: i32, %arg1: i32) -> (i32, i32) {
    %c0_i32 = arith.constant 0 : i32
    %c0_i32_0 = arith.constant 0 : i32
    %c0_i32_1 = arith.constant 0 : i32
    return %c0_i32, %c0_i32_0 : i32, i32
  }
  func.func @transform_8(%arg0: i32, %arg1: i32) -> (i32, i32) {
    %c0_i32 = arith.constant 0 : i32
    %c0_i32_0 = arith.constant 0 : i32
    %c0_i32_1 = arith.constant 0 : i32
    return %c0_i32, %c0_i32_0 : i32, i32
  }
  func.func @transform_9(%arg0: i32, %arg1: i32) -> (i32, i32, i32) {
    %c0_i32 = arith.constant 0 : i32
    %c0_i32_0 = arith.constant 0 : i32
    return %arg1, %arg0, %c0_i32 : i32, i32, i32
  }
}

module attributes {stable_mosaic.version = 11 : i64} {
  func.func @_moe_kernel(%arg0: i32, %arg1: i32, %arg2: memref<1x128x32xbf16, #tpu.memory_space<vmem>>, %arg3: memref<1x128x6xf32, #tpu.memory_space<vmem>>, %arg4: memref<32x16xbf16, #tpu.memory_space<vmem>>, %arg5: memref<16x32xbf16, #tpu.memory_space<vmem>>, %arg6: memref<4x16xf32, #tpu.memory_space<vmem>>, %arg7: memref<16x16xf32, #tpu.memory_space<vmem>>, %arg8: memref<1x32x128xbf16, #tpu.memory_space<vmem>>) attributes {dimension_semantics = [#tpu.dimension_semantics<parallel>, #tpu.dimension_semantics<parallel>], iteration_bounds = array<i64: 2, 2>, scalar_prefetch = 0 : i64, scratch_operands = 0 : i64, tpu.core_type = #tpu.core_type<tc>, window_params = [{transform_indices = @transform_0, window_bounds = array<i64: 1, 128, 32>}, {transform_indices = @transform_1, window_bounds = array<i64: 1, 128, 6>}, {pipeline_mode = #tpu.pipeline_mode<synchronous>, transform_indices = @transform_2, window_bounds = array<i64: 32, 16>}, {pipeline_mode = #tpu.pipeline_mode<synchronous>, transform_indices = @transform_3, window_bounds = array<i64: 16, 32>}, {pipeline_mode = #tpu.pipeline_mode<synchronous>, transform_indices = @transform_4, window_bounds = array<i64: 4, 16>}, {pipeline_mode = #tpu.pipeline_mode<synchronous>, transform_indices = @transform_5, window_bounds = array<i64: 16, 16>}, {transform_indices = @transform_6, window_bounds = array<i64: 1, 32, 128>}]} {
    %c0 = arith.constant 0 : index
    %c0_0 = arith.constant 0 : index
    %c0_1 = arith.constant 0 : index
    %0 = vector.load %arg2[%c0, %c0_0, %c0_1] : memref<1x128x32xbf16, #tpu.memory_space<vmem>>, vector<1x128x32xbf16>
    %1 = vector.shape_cast %0 : vector<1x128x32xbf16> to vector<128x32xbf16>
    %c0_2 = arith.constant 0 : index
    %c0_3 = arith.constant 0 : index
    %c0_4 = arith.constant 0 : index
    %2 = vector.load %arg3[%c0_2, %c0_3, %c0_4] : memref<1x128x6xf32, #tpu.memory_space<vmem>>, vector<1x128x6xf32>
    %3 = vector.shape_cast %2 : vector<1x128x6xf32> to vector<128x6xf32>
    %4 = vector.extract_strided_slice %3 {offsets = [0, 0], sizes = [128, 4], strides = [1, 1]} : vector<128x6xf32> to vector<128x4xf32>
    %c0_5 = arith.constant 0 : index
    %c0_6 = arith.constant 0 : index
    %5 = vector.load %arg4[%c0_5, %c0_6] : memref<32x16xbf16, #tpu.memory_space<vmem>>, vector<32x16xbf16>
    %cst = arith.constant dense<0.000000e+00> : vector<128x16xf32>
    %6 = tpu.matmul %1, %5, %cst {dimension_numbers = #tpu.dot_dimension_numbers<[1], [0], [0], [1], [0, 0, 1, 1], [], []>} : vector<128x32xbf16>, vector<32x16xbf16>, vector<128x16xf32> -> vector<128x16xf32>
    %c0_7 = arith.constant 0 : index
    %c0_8 = arith.constant 0 : index
    %7 = vector.load %arg6[%c0_7, %c0_8] : memref<4x16xf32, #tpu.memory_space<vmem>>, vector<4x16xf32>
    %cst_9 = arith.constant dense<0.000000e+00> : vector<128x16xf32>
    %8 = tpu.matmul %4, %7, %cst_9 {dimension_numbers = #tpu.dot_dimension_numbers<[1], [0], [0], [1], [0, 0, 1, 1], [], []>} : vector<128x4xf32>, vector<4x16xf32>, vector<128x16xf32> -> vector<128x16xf32>
    %9 = arith.mulf %8, %6 : vector<128x16xf32>
    %c0_10 = arith.constant 0 : index
    %c0_11 = arith.constant 0 : index
    %10 = vector.load %arg7[%c0_10, %c0_11] : memref<16x16xf32, #tpu.memory_space<vmem>>, vector<16x16xf32>
    %cst_12 = arith.constant dense<0.000000e+00> : vector<128x16xf32>
    %11 = tpu.matmul %9, %10, %cst_12 {dimension_numbers = #tpu.dot_dimension_numbers<[1], [0], [0], [1], [0, 0, 1, 1], [], []>} : vector<128x16xf32>, vector<16x16xf32>, vector<128x16xf32> -> vector<128x16xf32>
    %12 = arith.mulf %8, %11 : vector<128x16xf32>
    %13 = arith.extf %1 : vector<128x32xbf16> to vector<128x32xf32>
    %14 = arith.truncf %12 : vector<128x16xf32> to vector<128x16xbf16>
    %c0_13 = arith.constant 0 : index
    %c0_14 = arith.constant 0 : index
    %15 = vector.load %arg5[%c0_13, %c0_14] : memref<16x32xbf16, #tpu.memory_space<vmem>>, vector<16x32xbf16>
    %cst_15 = arith.constant dense<0.000000e+00> : vector<128x32xf32>
    %16 = tpu.matmul %14, %15, %cst_15 {dimension_numbers = #tpu.dot_dimension_numbers<[1], [0], [0], [1], [0, 0, 1, 1], [], []>} : vector<128x16xbf16>, vector<16x32xbf16>, vector<128x32xf32> -> vector<128x32xf32>
    %17 = arith.addf %13, %16 : vector<128x32xf32>
    %18 = tpu.transpose %17, [1, 0] : vector<128x32xf32> -> vector<32x128xf32>
    %19 = arith.truncf %18 : vector<32x128xf32> to vector<32x128xbf16>
    %c0_16 = arith.constant 0 : index
    %c0_17 = arith.constant 0 : index
    %c0_18 = arith.constant 0 : index
    %20 = vector.load %arg8[%c0_16, %c0_17, %c0_18] : memref<1x32x128xbf16, #tpu.memory_space<vmem>>, vector<1x32x128xbf16>
    %21 = vector.shape_cast %20 : vector<1x32x128xbf16> to vector<32x128xbf16>
    %22 = vector.shape_cast %19 : vector<32x128xbf16> to vector<1x32x128xbf16>
    tpu.vector_store %arg8[%c0_16, %c0_17, %c0_18], %22 {strides = array<i32>} : memref<1x32x128xbf16, #tpu.memory_space<vmem>>, vector<1x32x128xbf16>,
    return
  }
  func.func @transform_0(%arg0: i32, %arg1: i32) -> (i32, i32, i32) {
    %c0_i32 = arith.constant 0 : i32
    %c0_i32_0 = arith.constant 0 : i32
    return %arg1, %arg0, %c0_i32 : i32, i32, i32
  }
  func.func @transform_1(%arg0: i32, %arg1: i32) -> (i32, i32, i32) {
    %c0_i32 = arith.constant 0 : i32
    %c0_i32_0 = arith.constant 0 : i32
    return %arg1, %arg0, %c0_i32 : i32, i32, i32
  }
  func.func @transform_2(%arg0: i32, %arg1: i32) -> (i32, i32) {
    %c0_i32 = arith.constant 0 : i32
    %c0_i32_0 = arith.constant 0 : i32
    %c0_i32_1 = arith.constant 0 : i32
    return %c0_i32, %c0_i32_0 : i32, i32
  }
  func.func @transform_3(%arg0: i32, %arg1: i32) -> (i32, i32) {
    %c0_i32 = arith.constant 0 : i32
    %c0_i32_0 = arith.constant 0 : i32
    %c0_i32_1 = arith.constant 0 : i32
    return %c0_i32, %c0_i32_0 : i32, i32
  }
  func.func @transform_4(%arg0: i32, %arg1: i32) -> (i32, i32) {
    %c0_i32 = arith.constant 0 : i32
    %c0_i32_0 = arith.constant 0 : i32
    %c0_i32_1 = arith.constant 0 : i32
    return %c0_i32, %c0_i32_0 : i32, i32
  }
  func.func @transform_5(%arg0: i32, %arg1: i32) -> (i32, i32) {
    %c0_i32 = arith.constant 0 : i32
    %c0_i32_0 = arith.constant 0 : i32
    %c0_i32_1 = arith.constant 0 : i32
    return %c0_i32, %c0_i32_0 : i32, i32
  }
  func.func @transform_6(%arg0: i32, %arg1: i32) -> (i32, i32, i32) {
    %c0_i32 = arith.constant 0 : i32
    %c0_i32_0 = arith.constant 0 : i32
    return %arg1, %c0_i32, %arg0 : i32, i32, i32
  }
}

</mosaic_0001>

<llo_original>
// kernel: tile.8
$region0: #{tile.8}
  #allocation0 [shape = 's32[1]{0}', space=sflag, size = 0x4, scoped, tag = 'scoped memory for tile.8']
  %s0 = inlined_call_operand.vmem [shape: f32[4,4], index: 0, kind: input, shape index: {}]
  %s1 = inlined_call_operand.vmem [shape: f32[4,4,4,4], index: 1, kind: output, shape index: {}]
  // Predicated region
  $region2: #{tile.8} parent=0 // pred_check
    _
  $region3: #{tile.8} parent=0 // pred_check_branch
    %3 = sbr.rel (0) target = $region5
  $region4: #{tile.8} parent=0 // pred_region
    _
  $region5: #{tile.8} parent=0 // pred_fallthru
    _
  %v4 = vld [vmem:[%s0] ss:$0 sm:$0xff]
  %5 = vst [vmem:[%s1] sm:$0xf] %v4
  %s6 = scalar_lea.vmem %s1, 16
  %7 = vst [vmem:[%s6] sm:$0xf] %v4
  %s8 = scalar_lea.vmem %s1, 32
  %9 = vst [vmem:[%s8] sm:$0xf] %v4
  %s10 = scalar_lea.vmem %s1, 48
  %11 = vst [vmem:[%s10] sm:$0xf] %v4
  %s12 = scalar_lea.vmem %s0, 1
  %v13 = vld [vmem:[%s12] ss:$0 sm:$0xff]
  %s14 = scalar_lea.vmem %s1, 4
  %15 = vst [vmem:[%s14] sm:$0xf] %v13
  %s16 = scalar_lea.vmem %s1, 20
  %17 = vst [vmem:[%s16] sm:$0xf] %v13
  %s18 = scalar_lea.vmem %s1, 36
  %19 = vst [vmem:[%s18] sm:$0xf] %v13
  %s20 = scalar_lea.vmem %s1, 52
  %21 = vst [vmem:[%s20] sm:$0xf] %v13
  %s22 = scalar_lea.vmem %s0, 2
  %v23 = vld [vmem:[%s22] ss:$0 sm:$0xff]
  %s24 = scalar_lea.vmem %s1, 8
  %25 = vst [vmem:[%s24] sm:$0xf] %v23
  %s26 = scalar_lea.vmem %s1, 24
  %27 = vst [vmem:[%s26] sm:$0xf] %v23
  %s28 = scalar_lea.vmem %s1, 40
  %29 = vst [vmem:[%s28] sm:$0xf] %v23
  %s30 = scalar_lea.vmem %s1, 56
  %31 = vst [vmem:[%s30] sm:$0xf] %v23
  %s32 = scalar_lea.vmem %s0, 3
  %v33 = vld [vmem:[%s32] ss:$0 sm:$0xff]
  %s34 = scalar_lea.vmem %s1, 12
  %35 = vst [vmem:[%s34] sm:$0xf] %v33
  %s36 = scalar_lea.vmem %s1, 28
  %37 = vst [vmem:[%s36] sm:$0xf] %v33
  %s38 = scalar_lea.vmem %s1, 44
  %39 = vst [vmem:[%s38] sm:$0xf] %v33
  %s40 = scalar_lea.vmem %s1, 60
  %41 = vst [vmem:[%s40] sm:$0xf] %v33

// kernel: tile.9
$region0: #{tile.9}
  %s0 = inlined_call_operand.vmem [shape: f32[4,4,4,4], index: 0, kind: input, shape index: {}]
  %s1 = inlined_call_operand.vmem [shape: f32[16,16], index: 1, kind: output, shape index: {}]
  $region1: #{tile.9} parent=0
    #allocation0 [shape = 'u8[65536]{0}', space=vmem, size = 0x10000, scoped, tag = 'scoped mem for input reshape']
    %s3 = sshllo.u32 0, 4
    %s4 = smul.addr 4, 15
    %s5 = scalar_lea.vmem %s0, %s4
    %v6 = vld [vmem:[%s5] sm:%s3]
    %s7 = scalar_lea.vmem [#allocation0], 120
    %8 = vst [vmem:[%s7] sm:%s3] %v6
    %s9 = smul.addr 4, 14
    %s10 = scalar_lea.vmem %s0, %s9
    %v11 = vld [vmem:[%s10] sm:%s3]
    %s12 = scalar_lea.vmem [#allocation0], 112
    %13 = vst [vmem:[%s12] sm:%s3] %v11
    %s14 = smul.addr 4, 13
    %s15 = scalar_lea.vmem %s0, %s14
    %v16 = vld [vmem:[%s15] sm:%s3]
    %s17 = scalar_lea.vmem [#allocation0], 104
    %18 = vst [vmem:[%s17] sm:%s3] %v16
    %s19 = smul.addr 4, 12
    %s20 = scalar_lea.vmem %s0, %s19
    %v21 = vld [vmem:[%s20] sm:%s3]
    %s22 = scalar_lea.vmem [#allocation0], 96
    %23 = vst [vmem:[%s22] sm:%s3] %v21
    %s24 = smul.addr 4, 11
    %s25 = scalar_lea.vmem %s0, %s24
    %v26 = vld [vmem:[%s25] sm:%s3]
    %s27 = scalar_lea.vmem [#allocation0], 88
    %28 = vst [vmem:[%s27] sm:%s3] %v26
    %s29 = smul.addr 4, 10
    %s30 = scalar_lea.vmem %s0, %s29
    %v31 = vld [vmem:[%s30] sm:%s3]
    %s32 = scalar_lea.vmem [#allocation0], 80
    %33 = vst [vmem:[%s32] sm:%s3] %v31
    %s34 = smul.addr 4, 9
    %s35 = scalar_lea.vmem %s0, %s34
    %v36 = vld [vmem:[%s35] sm:%s3]
    %s37 = scalar_lea.vmem [#allocation0], 72
    %38 = vst [vmem:[%s37] sm:%s3] %v36
    %s39 = smul.addr 4, 8
    %s40 = scalar_lea.vmem %s0, %s39
    %v41 = vld [vmem:[%s40] sm:%s3]
    %s42 = scalar_lea.vmem [#allocation0], 64
    %43 = vst [vmem:[%s42] sm:%s3] %v41
    %s44 = smul.addr 4, 7
    %s45 = scalar_lea.vmem %s0, %s44
    %v46 = vld [vmem:[%s45] sm:%s3]
    %s47 = scalar_lea.vmem [#allocation0], 56
    %48 = vst [vmem:[%s47] sm:%s3] %v46
    %s49 = smul.addr 4, 6
    %s50 = scalar_lea.vmem %s0, %s49
    %v51 = vld [vmem:[%s50] sm:%s3]
    %s52 = scalar_lea.vmem [#allocation0], 48
    %53 = vst [vmem:[%s52] sm:%s3] %v51
    %s54 = smul.addr 4, 5
    %s55 = scalar_lea.vmem %s0, %s54
    %v56 = vld [vmem:[%s55] sm:%s3]
    %s57 = scalar_lea.vmem [#allocation0], 40
    %58 = vst [vmem:[%s57] sm:%s3] %v56
    %s59 = smul.addr 4, 4
    %s60 = scalar_lea.vmem %s0, %s59
    %v61 = vld [vmem:[%s60] sm:%s3]
    %s62 = scalar_lea.vmem [#allocation0], 32
    %63 = vst [vmem:[%s62] sm:%s3] %v61
    %s64 = smul.addr 4, 3
    %s65 = scalar_lea.vmem %s0, %s64
    %v66 = vld [vmem:[%s65] sm:%s3]
    %s67 = scalar_lea.vmem [#allocation0], 24
    %68 = vst [vmem:[%s67] sm:%s3] %v66
    %s69 = smul.addr 4, 2
    %s70 = scalar_lea.vmem %s0, %s69
    %v71 = vld [vmem:[%s70] sm:%s3]
    %s72 = scalar_lea.vmem [#allocation0], 16
    %73 = vst [vmem:[%s72] sm:%s3] %v71
    %s74 = scalar_lea.vmem %s0, 4
    %v75 = vld [vmem:[%s74] sm:%s3]
    %s76 = scalar_lea.vmem [#allocation0], 8
    %77 = vst [vmem:[%s76] sm:%s3] %v75
    %v78 = vld [vmem:[%s0] sm:%s3]
    %79 = vst [vmem:[#allocation0] sm:%s3] %v78
    %v80 = vld [vmem:[#allocation0] ss:$8 sm:$0xf]
    %v81 = vld [vmem:[#allocation0] ss:$8 sm:$0xf0]
    %vm82 = vcmask 1047556
    %v83 = vsel %vm82, %v81, %v80
    %vm84 = vcmask 31744
    %85 = vst.msk [vmem:[%s1] sm:$0xff] %vm84, %v83
    %s86 = scalar_lea.vmem [#allocation0], 64
    %v87 = vld [vmem:[%s86] ss:$8 sm:$0xf]
    %s88 = scalar_lea.vmem [#allocation0], 64
    %v89 = vld [vmem:[%s88] ss:$8 sm:$0xf0]
    %vm90 = vcmask 1047556
    %v91 = vsel %vm90, %v89, %v87
    %vm92 = vcmask 31744
    %s93 = scalar_lea.vmem %s1, 8
    %94 = vst.msk [vmem:[%s93] sm:$0xff] %vm92, %v91
    %s95 = scalar_lea.vmem [#allocation0], 3
    %v96 = vld [vmem:[%s95] ss:$8 sm:$0xf]
    %s97 = scalar_lea.vmem [#allocation0], 3
    %v98 = vld [vmem:[%s97] ss:$8 sm:$0xf0]
    %vm99 = vcmask 1047556
    %v100 = vsel %vm99, %v98, %v96
    %101 = vrot.lane.b32.xlu0 %v100, 12
    %v102 = vpop.permute.xlu0 %101
    %vm103 = vcmask 130144
    %104 = vst.msk [vmem:[%s1] sm:$0xff] %vm103, %v102
    %s105 = scalar_lea.vmem [#allocation0], 67
    %v106 = vld [vmem:[%s105] ss:$8 sm:$0xf]
    %s107 = scalar_lea.vmem [#allocation0], 67
    %v108 = vld [vmem:[%s107] ss:$8 sm:$0xf0]
    %vm109 = vcmask 1047556
    %v110 = vsel %vm109, %v108, %v106
    %111 = vrot.lane.b32.xlu0 %v110, 12
    %v112 = vpop.permute.xlu0 %111
    %vm113 = vcmask 130144
    %s114 = scalar_lea.vmem %s1, 8
    %115 = vst.msk [vmem:[%s114] sm:$0xff] %vm113, %v112
    %s116 = scalar_lea.vmem [#allocation0], 2
    %v117 = vld [vmem:[%s116] ss:$8 sm:$0xf]
    %s118 = scalar_lea.vmem [#allocation0], 2
    %v119 = vld [vmem:[%s118] ss:$8 sm:$0xf0]
    %vm120 = vcmask 1047556
    %v121 = vsel %vm120, %v119, %v117
    %122 = vrot.lane.b32.xlu0 %v121, 8
    %v123 = vpop.permute.xlu0 %122
    %vm124 = vcmask 97344
    %125 = vst.msk [vmem:[%s1] sm:$0xff] %vm124, %v123
    %s126 = scalar_lea.vmem [#allocation0], 66
    %v127 = vld [vmem:[%s126] ss:$8 sm:$0xf]
    %s128 = scalar_lea.vmem [#allocation0], 66
    %v129 = vld [vmem:[%s128] ss:$8 sm:$0xf0]
    %vm130 = vcmask 1047556
    %v131 = vsel %vm130, %v129, %v127
    %132 = vrot.lane.b32.xlu0 %v131, 8
    %v133 = vpop.permute.xlu0 %132
    %vm134 = vcmask 97344
    %s135 = scalar_lea.vmem %s1, 8
    %136 = vst.msk [vmem:[%s135] sm:$0xff] %vm134, %v133
    %s137 = scalar_lea.vmem [#allocation0], 1
    %v138 = vld [vmem:[%s137] ss:$8 sm:$0xf]
    %s139 = scalar_lea.vmem [#allocation0], 1
    %v140 = vld [vmem:[%s139] ss:$8 sm:$0xf0]
    %vm141 = vcmask 1047556
    %v142 = vsel %vm141, %v140, %v138
    %143 = vrot.lane.b32.xlu0 %v142, 4
    %v144 = vpop.permute.xlu0 %143
    %vm145 = vcmask 64544
    %146 = vst.msk [vmem:[%s1] sm:$0xff] %vm145, %v144
    %s147 = scalar_lea.vmem [#allocation0], 65
    %v148 = vld [vmem:[%s147] ss:$8 sm:$0xf]
    %s149 = scalar_lea.vmem [#allocation0], 65
    %v150 = vld [vmem:[%s149] ss:$8 sm:$0xf0]
    %vm151 = vcmask 1047556
    %v152 = vsel %vm151, %v150, %v148
    %153 = vrot.lane.b32.xlu0 %v152, 4
    %v154 = vpop.permute.xlu0 %153
    %vm155 = vcmask 64544
    %s156 = scalar_lea.vmem %s1, 8
    %157 = vst.msk [vmem:[%s156] sm:$0xff] %vm155, %v154

// kernel: scab_upsample_forward.2
$region0: #{scab_upsample_forward.2}
  #allocation0 [shape = 'u32[]', space=smem, size = 0x4, offset = 0x4, fixed_abs, tag = 'smem constant byte address 0x4 - core index']
  #allocation1 [shape = 'u32[144,128]{1,0:T(1,128)}', space=vmem, size = 0x12000, scoped, tag = 'internal scratch']
  %s0 = inlined_call_operand.vmem [shape: bf16[2,256,32], index: 0, kind: input, shape index: {}]
  %s1 = inlined_call_operand.vmem [shape: f32[256,4], index: 1, kind: input, shape index: {}]
  %s2 = inlined_call_operand.vmem [shape: f32[4,32], index: 2, kind: input, shape index: {}]
  %s3 = inlined_call_operand.vmem [shape: bf16[32,32], index: 3, kind: input, shape index: {}]
  %s4 = inlined_call_operand.vmem [shape: f32[1,32], index: 4, kind: input, shape index: {}]
  %s5 = inlined_call_operand.vmem [shape: bf16[32,32], index: 5, kind: input, shape index: {}]
  %s6 = inlined_call_operand.vmem [shape: f32[1,32], index: 6, kind: input, shape index: {}]
  %s7 = inlined_call_operand.vmem [shape: bf16[32,6], index: 7, kind: input, shape index: {}]
  %s8 = inlined_call_operand.vmem [shape: f32[1,6], index: 8, kind: input, shape index: {}]
  %s9 = inlined_call_operand.vmem [shape: f32[2,256,6], index: 9, kind: output, shape index: {}]
  %s10 = sld [smem:[#allocation0]]
  $region69: #{scab_upsample_forward.2} parent=0
    _
  %s12 = ssub.s32 1, %s10
  %s13 = scalar_select 0, %s12, %s10
  loop: start=0, step=1, limit=6
  $region2: #{scab_upsample_forward.2} parent=0 // loop_pre_header
    _
  $region3: #{scab_upsample_forward.2} parent=0 // loop_header
    %s15 = sphi 0, %s19
    %p16 = scmp.ge.s32.totalorder %s15, 6
    %s22 = sphi 0, %s34
    %s23 = sphi 0, %s30
    %s24 = sphi 0, %s22
    %s25 = sphi 0, %s23
    %s26 = sphi 0, %s24
    %s27 = sphi 0, %s25
    %s39 = sphi 0, %s41
    %s42 = sphi 0, %s39
    %s43 = sphi 0, %s42
    %s59 = sphi 0, %s43
    %s65 = sphi 0, %s67
    %s68 = sphi 0, %s65
    %s69 = sphi 0, %s68
    %s85 = sphi 0, %s69
    %s89 = sphi 0, %s89
    %s91 = sphi 0, %s89
    %s92 = sphi 0, %s91
    %s106 = sphi 0, %s92
    %s110 = sphi 0, %s110
    %s112 = sphi 0, %s110
    %s113 = sphi 0, %s112
    %s127 = sphi 0, %s113
    %s131 = sphi 0, %s131
    %s133 = sphi 0, %s131
    %s134 = sphi 0, %s133
    %s148 = sphi 0, %s134
    %s152 = sphi 0, %s152
    %s154 = sphi 0, %s152
    %s155 = sphi 0, %s154
    %s169 = sphi 0, %s155
    %s173 = sphi 0, %s173
    %s175 = sphi 0, %s173
    %s176 = sphi 0, %s175
    %s190 = sphi 0, %s176
    %s194 = sphi 0, %s194
    %s196 = sphi 0, %s194
    %s197 = sphi 0, %s196
    %s211 = sphi 0, %s197
    %s215 = sphi 0, %s215
    %s217 = sphi 0, %s215
    %s218 = sphi 0, %s217
    %s232 = sphi 0, %s218
    %s240 = sphi 0, %s242
    %s243 = sphi 0, %s240
    %s244 = sphi 0, %s243
    %s260 = sphi 0, %s244
  $region4: #{scab_upsample_forward.2} parent=0 // loop_header_branch
    %18 = sbr.rel (%p16) target = $region8
  $region5: #{scab_upsample_forward.2} parent=0 // loop_body
    %s20 = ssub.s32 %s15, 1
    %s21 = ssub.s32 %s15, 2
    %s28 = sadd.s32 1, %s23
    %p29 = scmp.ge.s32.totalorder %s28, 2
    %s30 = scalar_select %p29, 0, %s28
    %s31 = sadd.s32 1, %s22
    %s32 = scalar_select %p29, %s31, %s22
    %p33 = scmp.ge.s32.totalorder %s32, 2
    %s34 = scalar_select %p33, 0, %s32
    %s35 = ssub.s32 %s23, %s30
    %s36 = ssub.s32 %s22, %s34
    %s37 = sor.u32 %s35, %s36
    %p38 = scmp.eq.s32.totalorder %s37, 0
    %s40 = sadd.s32 %s39, 1
    %s41 = scalar_select %p38, %s39, %s40
    %p44 = pneg %p38
    %p45 = scmp.eq.s32.totalorder %s15, 3
    %p46 = por %p44, %p45
    %p47 = scmp.ne.s32.totalorder %s39, %s42
    %p48 = scmp.eq.s32.totalorder %s15, 0
    %p49 = por %p47, %p48
    %p50 = scmp.ne.s32.totalorder %s39, %s42
    %p51 = scmp.eq.s32.totalorder %s20, 3
    %p52 = por %p50, %p51
    %p53 = scmp.ne.s32.totalorder %s42, %s43
    %p54 = scmp.eq.s32.totalorder %s20, 0
    %p55 = por %p53, %p54
    %p56 = scmp.ne.s32.totalorder %s42, %s43
    %p57 = scmp.eq.s32.totalorder %s21, 3
    %p58 = por %p56, %p57
    %p60 = scmp.ne.s32.totalorder %s43, %s59
    %p61 = scmp.eq.s32.totalorder %s21, 0
    %p62 = por %p60, %p61
    %s63 = ssub.s32 %s22, %s34
    %p64 = scmp.eq.s32.totalorder %s63, 0
    %s66 = sadd.s32 %s65, 1
    %s67 = scalar_select %p64, %s65, %s66
    %p70 = pneg %p64
    %p71 = scmp.eq.s32.totalorder %s15, 3
    %p72 = por %p70, %p71
    %p73 = scmp.ne.s32.totalorder %s65, %s68
    %p74 = scmp.eq.s32.totalorder %s15, 0
    %p75 = por %p73, %p74
    %p76 = scmp.ne.s32.totalorder %s65, %s68
    %p77 = scmp.eq.s32.totalorder %s20, 3
    %p78 = por %p76, %p77
    %p79 = scmp.ne.s32.totalorder %s68, %s69
    %p80 = scmp.eq.s32.totalorder %s20, 0
    %p81 = por %p79, %p80
    %p82 = scmp.ne.s32.totalorder %s68, %s69
    %p83 = scmp.eq.s32.totalorder %s21, 3
    %p84 = por %p82, %p83
    %p86 = scmp.ne.s32.totalorder %s69, %s85
    %p87 = scmp.eq.s32.totalorder %s21, 0
    %p88 = por %p86, %p87
    %s90 = sadd.s32 %s89, 1
    %p93 = scmp.eq.s32.totalorder %s15, 3
    %p94 = scmp.ne.s32.totalorder %s89, %s91
    %p95 = scmp.eq.s32.totalorder %s15, 0
    %p96 = por %p94, %p95
    %p97 = scmp.ne.s32.totalorder %s89, %s91
    %p98 = scmp.eq.s32.totalorder %s20, 3
    %p99 = por %p97, %p98
    %p100 = scmp.ne.s32.totalorder %s91, %s92
    %p101 = scmp.eq.s32.totalorder %s20, 0
    %p102 = por %p100, %p101
    %p103 = scmp.ne.s32.totalorder %s91, %s92
    %p104 = scmp.eq.s32.totalorder %s21, 3
    %p105 = por %p103, %p104
    %p107 = scmp.ne.s32.totalorder %s92, %s106
    %p108 = scmp.eq.s32.totalorder %s21, 0
    %p109 = por %p107, %p108
    %s111 = sadd.s32 %s110, 1
    %p114 = scmp.eq.s32.totalorder %s15, 3
    %p115 = scmp.ne.s32.totalorder %s110, %s112
    %p116 = scmp.eq.s32.totalorder %s15, 0
    %p117 = por %p115, %p116
    %p118 = scmp.ne.s32.totalorder %s110, %s112
    %p119 = scmp.eq.s32.totalorder %s20, 3
    %p120 = por %p118, %p119
    %p121 = scmp.ne.s32.totalorder %s112, %s113
    %p122 = scmp.eq.s32.totalorder %s20, 0
    %p123 = por %p121, %p122
    %p124 = scmp.ne.s32.totalorder %s112, %s113
    %p125 = scmp.eq.s32.totalorder %s21, 3
    %p126 = por %p124, %p125
    %p128 = scmp.ne.s32.totalorder %s113, %s127
    %p129 = scmp.eq.s32.totalorder %s21, 0
    %p130 = por %p128, %p129
    %s132 = sadd.s32 %s131, 1
    %p135 = scmp.eq.s32.totalorder %s15, 3
    %p136 = scmp.ne.s32.totalorder %s131, %s133
    %p137 = scmp.eq.s32.totalorder %s15, 0
    %p138 = por %p136, %p137
    %p139 = scmp.ne.s32.totalorder %s131, %s133
    %p140 = scmp.eq.s32.totalorder %s20, 3
    %p141 = por %p139, %p140
    %p142 = scmp.ne.s32.totalorder %s133, %s134
    %p143 = scmp.eq.s32.totalorder %s20, 0
    %p144 = por %p142, %p143
    %p145 = scmp.ne.s32.totalorder %s133, %s134
    %p146 = scmp.eq.s32.totalorder %s21, 3
    %p147 = por %p145, %p146
    %p149 = scmp.ne.s32.totalorder %s134, %s148
    %p150 = scmp.eq.s32.totalorder %s21, 0
    %p151 = por %p149, %p150
    %s153 = sadd.s32 %s152, 1
    %p156 = scmp.eq.s32.totalorder %s15, 3
    %p157 = scmp.ne.s32.totalorder %s152, %s154
    %p158 = scmp.eq.s32.totalorder %s15, 0
    %p159 = por %p157, %p158
    %p160 = scmp.ne.s32.totalorder %s152, %s154
    %p161 = scmp.eq.s32.totalorder %s20, 3
    %p162 = por %p160, %p161
    %p163 = scmp.ne.s32.totalorder %s154, %s155
    %p164 = scmp.eq.s32.totalorder %s20, 0
    %p165 = por %p163, %p164
    %p166 = scmp.ne.s32.totalorder %s154, %s155
    %p167 = scmp.eq.s32.totalorder %s21, 3
    %p168 = por %p166, %p167
    %p170 = scmp.ne.s32.totalorder %s155, %s169
    %p171 = scmp.eq.s32.totalorder %s21, 0
    %p172 = por %p170, %p171
    %s174 = sadd.s32 %s173, 1
    %p177 = scmp.eq.s32.totalorder %s15, 3
    %p178 = scmp.ne.s32.totalorder %s173, %s175
    %p179 = scmp.eq.s32.totalorder %s15, 0
    %p180 = por %p178, %p179
    %p181 = scmp.ne.s32.totalorder %s173, %s175
    %p182 = scmp.eq.s32.totalorder %s20, 3
    %p183 = por %p181, %p182
    %p184 = scmp.ne.s32.totalorder %s175, %s176
    %p185 = scmp.eq.s32.totalorder %s20, 0
    %p186 = por %p184, %p185
    %p187 = scmp.ne.s32.totalorder %s175, %s176
    %p188 = scmp.eq.s32.totalorder %s21, 3
    %p189 = por %p187, %p188
    %p191 = scmp.ne.s32.totalorder %s176, %s190
    %p192 = scmp.eq.s32.totalorder %s21, 0
    %p193 = por %p191, %p192
    %s195 = sadd.s32 %s194, 1
    %p198 = scmp.eq.s32.totalorder %s15, 3
    %p199 = scmp.ne.s32.totalorder %s194, %s196
    %p200 = scmp.eq.s32.totalorder %s15, 0
    %p201 = por %p199, %p200
    %p202 = scmp.ne.s32.totalorder %s194, %s196
    %p203 = scmp.eq.s32.totalorder %s20, 3
    %p204 = por %p202, %p203
    %p205 = scmp.ne.s32.totalorder %s196, %s197
    %p206 = scmp.eq.s32.totalorder %s20, 0
    %p207 = por %p205, %p206
    %p208 = scmp.ne.s32.totalorder %s196, %s197
    %p209 = scmp.eq.s32.totalorder %s21, 3
    %p210 = por %p208, %p209
    %p212 = scmp.ne.s32.totalorder %s197, %s211
    %p213 = scmp.eq.s32.totalorder %s21, 0
    %p214 = por %p212, %p213
    %s216 = sadd.s32 %s215, 1
    %p219 = scmp.eq.s32.totalorder %s15, 3
    %p220 = scmp.ne.s32.totalorder %s215, %s217
    %p221 = scmp.eq.s32.totalorder %s15, 0
    %p222 = por %p220, %p221
    %p223 = scmp.ne.s32.totalorder %s215, %s217
    %p224 = scmp.eq.s32.totalorder %s20, 3
    %p225 = por %p223, %p224
    %p226 = scmp.ne.s32.totalorder %s217, %s218
    %p227 = scmp.eq.s32.totalorder %s20, 0
    %p228 = por %p226, %p227
    %p229 = scmp.ne.s32.totalorder %s217, %s218
    %p230 = scmp.eq.s32.totalorder %s21, 3
    %p231 = por %p229, %p230
    %p233 = scmp.ne.s32.totalorder %s218, %s232
    %p234 = scmp.eq.s32.totalorder %s21, 0
    %p235 = por %p233, %p234
    %s236 = ssub.s32 %s23, %s30
    %s237 = ssub.s32 %s22, %s34
    %s238 = sor.u32 %s236, %s237
    %p239 = scmp.eq.s32.totalorder %s238, 0
    %s241 = sadd.s32 %s240, 1
    %s242 = scalar_select %p239, %s240, %s241
    %p245 = pneg %p239
    %p246 = scmp.eq.s32.totalorder %s15, 3
    %p247 = por %p245, %p246
    %p248 = scmp.ne.s32.totalorder %s240, %s243
    %p249 = scmp.eq.s32.totalorder %s15, 0
    %p250 = por %p248, %p249
    %p251 = scmp.ne.s32.totalorder %s240, %s243
    %p252 = scmp.eq.s32.totalorder %s20, 3
    %p253 = por %p251, %p252
    %p254 = scmp.ne.s32.totalorder %s243, %s244
    %p255 = scmp.eq.s32.totalorder %s20, 0
    %p256 = por %p254, %p255
    %p257 = scmp.ne.s32.totalorder %s243, %s244
    %p258 = scmp.eq.s32.totalorder %s21, 3
    %p259 = por %p257, %p258
    %p261 = scmp.ne.s32.totalorder %s244, %s260
    %p262 = scmp.eq.s32.totalorder %s21, 0
    %p263 = por %p261, %p262
    %p264 = scmp.le.s32.totalorder 1, %s15
    %p265 = scmp.lt.s32.totalorder %s15, 5
    %p266 = pnand %p264, %p265
    %p267 = pneg %p266
    // Predicated region
    $region9: #{scab_upsample_forward.2} parent=5 // pred_check
      _
    $region10: #{scab_upsample_forward.2} parent=5 // pred_check_branch
      %269 = sbr.rel (%p266) target = $region12
    $region11: #{scab_upsample_forward.2} parent=5 // pred_region
      %s270 = ssub.s32 %s15, 1
      // Predicated region
      $region13: #{scab_upsample_forward.2} parent=11 // pred_check
        %p271 = pneg %p102
      $region14: #{scab_upsample_forward.2} parent=11 // pred_check_branch
        %273 = sbr.rel (%p271) target = $region16
      $region15: #{scab_upsample_forward.2} parent=11 // pred_region
        _
      $region16: #{scab_upsample_forward.2} parent=11 // pred_fallthru
        _
      // Predicated region
      $region17: #{scab_upsample_forward.2} parent=11 // pred_check
        %p274 = pneg %p123
      $region18: #{scab_upsample_forward.2} parent=11 // pred_check_branch
        %276 = sbr.rel (%p274) target = $region20
      $region19: #{scab_upsample_forward.2} parent=11 // pred_region
        _
      $region20: #{scab_upsample_forward.2} parent=11 // pred_fallthru
        _
      // Predicated region
      $region21: #{scab_upsample_forward.2} parent=11 // pred_check
        %p277 = pneg %p144
      $region22: #{scab_upsample_forward.2} parent=11 // pred_check_branch
        %279 = sbr.rel (%p277) target = $region24
      $region23: #{scab_upsample_forward.2} parent=11 // pred_region
        _
      $region24: #{scab_upsample_forward.2} parent=11 // pred_fallthru
        _
      // Predicated region
      $region25: #{scab_upsample_forward.2} parent=11 // pred_check
        %p280 = pneg %p165
      $region26: #{scab_upsample_forward.2} parent=11 // pred_check_branch
        %282 = sbr.rel (%p280) target = $region28
      $region27: #{scab_upsample_forward.2} parent=11 // pred_region
        _
      $region28: #{scab_upsample_forward.2} parent=11 // pred_fallthru
        _
      // Predicated region
      $region29: #{scab_upsample_forward.2} parent=11 // pred_check
        %p283 = pneg %p186
      $region30: #{scab_upsample_forward.2} parent=11 // pred_check_branch
        %285 = sbr.rel (%p283) target = $region32
      $region31: #{scab_upsample_forward.2} parent=11 // pred_region
        _
      $region32: #{scab_upsample_forward.2} parent=11 // pred_fallthru
        _
      // Predicated region
      $region33: #{scab_upsample_forward.2} parent=11 // pred_check
        %p286 = pneg %p207
      $region34: #{scab_upsample_forward.2} parent=11 // pred_check_branch
        %288 = sbr.rel (%p286) target = $region36
      $region35: #{scab_upsample_forward.2} parent=11 // pred_region
        _
      $region36: #{scab_upsample_forward.2} parent=11 // pred_fallthru
        _
      // Predicated region
      $region37: #{scab_upsample_forward.2} parent=11 // pred_check
        %p289 = pneg %p228
      $region38: #{scab_upsample_forward.2} parent=11 // pred_check_branch
        %291 = sbr.rel (%p289) target = $region40
      $region39: #{scab_upsample_forward.2} parent=11 // pred_region
        _
      $region40: #{scab_upsample_forward.2} parent=11 // pred_fallthru
        _
    $region12: #{scab_upsample_forward.2} parent=5 // pred_fallthru
      _
    %p292 = scmp.lt.s32.totalorder %s15, 4
    // Predicated region
    $region41: #{scab_upsample_forward.2} parent=5 // pred_check
      %p293 = pneg %p292
    $region42: #{scab_upsample_forward.2} parent=5 // pred_check_branch
      %295 = sbr.rel (%p293) target = $region44
    $region43: #{scab_upsample_forward.2} parent=5 // pred_region
      // Predicated region
      $region45: #{scab_upsample_forward.2} parent=43 // pred_check
        %p296 = pneg %p49
      $region46: #{scab_upsample_forward.2} parent=43 // pred_check_branch
        %298 = sbr.rel (%p296) target = $region48
      $region47: #{scab_upsample_forward.2} parent=43 // pred_region
        %s299 = smul.u32 16, %s22
        %p300 = scmp.lt.s32.totalorder %s23, 1
        %s301 = scalar_select %p300, %s23, 1
        %p302 = scmp.lt.s32.totalorder %s299, 31
        %s303 = scalar_select %p302, %s299, 31
        %s304 = smul.addr %s301, 32
        %s305 = sadd.s32 %s303, %s304
        %s306 = smul.addr %s305, 4
        %s307 = scalar_lea.vmem %s0, %s306
        %s308 = smul.u32 16, %s22
      $region48: #{scab_upsample_forward.2} parent=43 // pred_fallthru
        _
      // Predicated region
      $region49: #{scab_upsample_forward.2} parent=43 // pred_check
        %p309 = pneg %p75
      $region50: #{scab_upsample_forward.2} parent=43 // pred_check_branch
        %311 = sbr.rel (%p309) target = $region52
      $region51: #{scab_upsample_forward.2} parent=43 // pred_region
        %s312 = smul.u32 16, %s22
        %p313 = scmp.lt.s32.totalorder %s312, 31
        %s314 = scalar_select %p313, %s312, 31
        %s315 = smul.addr %s314, 8
        %s316 = scalar_lea.vmem %s1, %s315
        %s317 = smul.u32 16, %s22
      $region52: #{scab_upsample_forward.2} parent=43 // pred_fallthru
        _
    $region44: #{scab_upsample_forward.2} parent=5 // pred_fallthru
      _
    %p318 = scmp.le.s32.totalorder 1, %s15
    %p319 = scmp.lt.s32.totalorder %s15, 5
    %p320 = pnand %p318, %p319
    %p321 = pneg %p320
    // Predicated region
    $region53: #{scab_upsample_forward.2} parent=5 // pred_check
      _
    $region54: #{scab_upsample_forward.2} parent=5 // pred_check_branch
      %323 = sbr.rel (%p320) target = $region56
    $region55: #{scab_upsample_forward.2} parent=5 // pred_region
      %s324 = ssub.s32 %s15, 1
      %s325 = smul.u32 16, %s24
      %p326 = scmp.lt.s32.totalorder %s25, 1
      %s327 = scalar_select %p326, %s25, 1
      %p328 = scmp.lt.s32.totalorder %s325, 31
      %s329 = scalar_select %p328, %s325, 31
      %s330 = smul.addr %s327, 32
      %s331 = sadd.s32 %s329, %s330
      %s332 = smul.addr %s331, 4
      %s333 = scalar_lea.vmem %s0, %s332
      %p334 = pneg %p55
      %p335 = pneg %p52
      %s336 = smul.u32 16, %s24
      %p337 = scmp.lt.s32.totalorder %s336, 31
      %s338 = scalar_select %p337, %s336, 31
      %s339 = smul.addr %s338, 8
      %s340 = scalar_lea.vmem %s1, %s339
      %p341 = pneg %p81
      %p342 = pneg %p78
      %p343 = pneg %p102
      %p344 = pneg %p99
      %p345 = pneg %p123
      %p346 = pneg %p120
      %p347 = pneg %p144
      %p348 = pneg %p141
      %p349 = pneg %p165
      %p350 = pneg %p162
      %p351 = pneg %p186
      %p352 = pneg %p183
      %p353 = pneg %p207
      %p354 = pneg %p204
      %p355 = pneg %p228
      %p356 = pneg %p225
      %p357 = pneg %p256
      %p358 = pneg %p253
      %s359 = smul.u32 16, %s24
      %p360 = scmp.lt.s32.totalorder %s25, 1
      %s361 = scalar_select %p360, %s25, 1
      %p362 = scmp.lt.s32.totalorder %s359, 31
      %s363 = scalar_select %p362, %s359, 31
      %s364 = smul.addr %s361, 32
      %s365 = sadd.s32 %s363, %s364
      %s366 = smul.addr %s365, 8
      %s367 = scalar_lea.vmem %s9, %s366
      %s368 = smul.u32 16, %s24
      %p369 = scmp.lt.s32.totalorder %s25, 1
      %s370 = scalar_select %p369, %s25, 1
      %p371 = scmp.lt.s32.totalorder %s368, 31
      %s372 = scalar_select %p371, %s368, 31
      %s373 = smul.addr %s370, 32
      %s374 = sadd.s32 %s372, %s373
      %s375 = smul.addr %s374, 4
      %s376 = scalar_lea.vmem %s0, %s375
      %s377 = smul.u32 16, %s24
      %s378 = smul.u32 16, %s24
      %p379 = scmp.lt.s32.totalorder %s378, 31
      %s380 = scalar_select %p379, %s378, 31
      %s381 = smul.addr %s380, 8
      %s382 = scalar_lea.vmem %s1, %s381
      %s383 = smul.u32 16, %s24
      %s384 = smul.u32 16, %s24
      %p385 = scmp.lt.s32.totalorder %s25, 1
      %s386 = scalar_select %p385, %s25, 1
      %p387 = scmp.lt.s32.totalorder %s384, 31
      %s388 = scalar_select %p387, %s384, 31
      %s389 = smul.addr %s386, 32
      %s390 = sadd.s32 %s388, %s389
      %s391 = smul.addr %s390, 8
      %s392 = scalar_lea.vmem %s9, %s391
      %s393 = smul.u32 16, %s24
      %v395 = vld [vmem:[%s376] sm:$0xf]
      %v396 = vld [vmem:[%s376 + $0x4] sm:$0xf]
      %v397 = vld [vmem:[%s376 + $0x8] sm:$0xf]
      %v398 = vld [vmem:[%s376 + $0xc] sm:$0xf]
      %v399 = vld [vmem:[%s376 + $0x10] sm:$0xf]
      %v400 = vld [vmem:[%s376 + $0x14] sm:$0xf]
      %v401 = vld [vmem:[%s376 + $0x18] sm:$0xf]
      %v402 = vld [vmem:[%s376 + $0x1c] sm:$0xf]
      %v403 = vld [vmem:[%s376 + $0x20] sm:$0xf]
      %v404 = vld [vmem:[%s376 + $0x24] sm:$0xf]
      %v405 = vld [vmem:[%s376 + $0x28] sm:$0xf]
      %v406 = vld [vmem:[%s376 + $0x2c] sm:$0xf]
      %v407 = vld [vmem:[%s376 + $0x30] sm:$0xf]
      %v408 = vld [vmem:[%s376 + $0x34] sm:$0xf]
      %v409 = vld [vmem:[%s376 + $0x38] sm:$0xf]
      %v410 = vld [vmem:[%s376 + $0x3c] sm:$0xf]
      %v411 = vld [vmem:[%s3] sm:$0xf]
      %v412 = vld [vmem:[%s3 + $0x4] sm:$0xf]
      %v413 = vld [vmem:[%s3 + $0x8] sm:$0xf]
      %v414 = vld [vmem:[%s3 + $0xc] sm:$0xf]
      %v415 = vld [vmem:[%s382] sm:$0xff]
      %v416 = vld [vmem:[%s382 + $0x8] sm:$0xff]
      %v417 = vld [vmem:[%s382 + $0x10] sm:$0xff]
      %v418 = vld [vmem:[%s382 + $0x18] sm:$0xff]
      %v419 = vld [vmem:[%s382 + $0x20] sm:$0xff]
      %v420 = vld [vmem:[%s382 + $0x28] sm:$0xff]
      %v421 = vld [vmem:[%s382 + $0x30] sm:$0xff]
      %v422 = vld [vmem:[%s382 + $0x38] sm:$0xff]
      %v423 = vld [vmem:[%s382 + $0x40] sm:$0xff]
      %v424 = vld [vmem:[%s382 + $0x48] sm:$0xff]
      %v425 = vld [vmem:[%s382 + $0x50] sm:$0xff]
      %v426 = vld [vmem:[%s382 + $0x58] sm:$0xff]
      %v427 = vld [vmem:[%s382 + $0x60] sm:$0xff]
      %v428 = vld [vmem:[%s382 + $0x68] sm:$0xff]
      %v429 = vld [vmem:[%s382 + $0x70] sm:$0xff]
      %v430 = vld [vmem:[%s382 + $0x78] sm:$0xff]
      %v431 = vld [vmem:[%s2] sm:$0xf]
      %vm432 = vcmask 31744
      %v434 = vsel %vm432, %v415, 0
      %v437 = vsel %vm432, %v416, 0
      %v440 = vsel %vm432, %v417, 0
      %v443 = vsel %vm432, %v418, 0
      %v446 = vsel %vm432, %v419, 0
      %v449 = vsel %vm432, %v420, 0
      %v452 = vsel %vm432, %v421, 0
      %v455 = vsel %vm432, %v422, 0
      %v458 = vsel %vm432, %v423, 0
      %v461 = vsel %vm432, %v424, 0
      %v464 = vsel %vm432, %v425, 0
      %v467 = vsel %vm432, %v426, 0
      %v470 = vsel %vm432, %v427, 0
      %v473 = vsel %vm432, %v428, 0
      %v476 = vsel %vm432, %v429, 0
      %v479 = vsel %vm432, %v430, 0
      %vm481 = vcmask 1043456
      %v483 = vsel %vm481, %v431, 0
      %485 = vmatprep.subr.mxu0 0.0
      %486 = vmatpush1.msra.mxu0 %v483
      %487 = vmatprep.subr.mxu0 0.0
      %488 = vmatpush1.msra.mxu0 0.0
      %489 = vmatprep.subr.mxu0 0.0
      %490 = vmatpush1.msra.mxu0 0.0
      %491 = vmatprep.subr.mxu0 0.0
      %492 = vmatpush1.msra.mxu0 0.0
      %493 = vmatprep.subr.mxu0 0.0
      %494 = vmatpush1.msra.mxu0 0.0
      %495 = vmatprep.subr.mxu0 0.0
      %496 = vmatpush1.msra.mxu0 0.0
      %497 = vmatprep.subr.mxu0 0.0
      %498 = vmatpush1.msra.mxu0 0.0
      %499 = vmatprep.subr.mxu0 0.0
      %500 = vmatpush1.msra.mxu0 0.0
      %501 = vmatprep.subr.mxu0 0.0
      %502 = vmatpush1.msra.mxu0 0.0
      %503 = vmatprep.subr.mxu0 0.0
      %504 = vmatpush1.msra.mxu0 0.0
      %505 = vmatprep.subr.mxu0 0.0
      %506 = vmatpush1.msra.mxu0 0.0
      %507 = vmatprep.subr.mxu0 0.0
      %508 = vmatpush1.msra.mxu0 0.0
      %509 = vmatprep.subr.mxu0 0.0
      %510 = vmatpush1.msra.mxu0 0.0
      %511 = vmatprep.subr.mxu0 0.0
      %512 = vmatpush1.msra.mxu0 0.0
      %513 = vmatprep.subr.mxu0 0.0
      %514 = vmatpush1.msra.mxu0 0.0
      %515 = vmatprep.subr.mxu0 0.0
      %516 = vmatpush1.msra.mxu0 0.0
      %517 = vmatprep.subr.mxu0 0.0
      %518 = vmatpush1.msra.mxu0 0.0
      %519 = vmatprep.subr.mxu0 0.0
      %520 = vmatpush1.msra.mxu0 0.0
      %521 = vmatprep.subr.mxu0 0.0
      %522 = vmatpush1.msra.mxu0 0.0
      %523 = vmatprep.subr.mxu0 0.0
      %524 = vmatpush1.msra.mxu0 0.0
      %525 = vmatprep.subr.mxu0 0.0
      %526 = vmatpush1.msra.mxu0 0.0
      %527 = vmatprep.subr.mxu0 0.0
      %528 = vmatpush1.msra.mxu0 0.0
      %529 = vmatprep.subr.mxu0 0.0
      %530 = vmatpush1.msra.mxu0 0.0
      %531 = vmatprep.subr.mxu0 0.0
      %532 = vmatpush1.msra.mxu0 0.0
      %533 = vmatprep.subr.mxu0 0.0
      %534 = vmatpush1.msra.mxu0 0.0
      %535 = vmatprep.subr.mxu0 0.0
      %536 = vmatpush1.msra.mxu0 0.0
      %537 = vmatprep.subr.mxu0 0.0
      %538 = vmatpush1.msra.mxu0 0.0
      %539 = vmatprep.subr.mxu0 0.0
      %540 = vmatpush1.msra.mxu0 0.0
      %541 = vmatprep.subr.mxu0 0.0
      %542 = vmatpush1.msra.mxu0 0.0
      %543 = vmatprep.subr.mxu0 0.0
      %544 = vmatpush1.msra.mxu0 0.0
      %545 = vmatprep.subr.mxu0 0.0
      %546 = vmatpush1.msra.mxu0 0.0
      %547 = vmatprep.subr.mxu0 0.0
      %548 = vmatpush1.msra.mxu0 0.0
      %549 = vmatprep.mubr.f32.mxu0 0.0
      %550 = vmatmul.mubr.f32.gmra.mrb[0].mxu0 %v434
      %v551 = vpop.f32.mrb[0].mxu0
      %v552 = vadd.f32 0.0, %v551
      %v553 = vpop.f32.mrb[0].mxu0
      %554 = vmatprep.mubr.f32.mxu0 0.0
      %555 = vmatmul.mubr.f32.gmra.mrb[0].mxu0 %v437
      %v556 = vpop.f32.mrb[0].mxu0
      %v557 = vadd.f32 0.0, %v556
      %v558 = vpop.f32.mrb[0].mxu0
      %559 = vmatprep.mubr.f32.mxu0 0.0
      %560 = vmatmul.mubr.f32.gmra.mrb[0].mxu0 %v440
      %v561 = vpop.f32.mrb[0].mxu0
      %v562 = vadd.f32 0.0, %v561
      %v563 = vpop.f32.mrb[0].mxu0
      %564 = vmatprep.mubr.f32.mxu0 0.0
      %565 = vmatmul.mubr.f32.gmra.mrb[0].mxu0 %v443
      %v566 = vpop.f32.mrb[0].mxu0
      %v567 = vadd.f32 0.0, %v566
      %v568 = vpop.f32.mrb[0].mxu0
      %569 = vmatprep.mubr.f32.mxu0 0.0
      %570 = vmatmul.mubr.f32.gmra.mrb[0].mxu0 %v446
      %v571 = vpop.f32.mrb[0].mxu0
      %v572 = vadd.f32 0.0, %v571
      %v573 = vpop.f32.mrb[0].mxu0
      %574 = vmatprep.mubr.f32.mxu0 0.0
      %575 = vmatmul.mubr.f32.gmra.mrb[0].mxu0 %v449
      %v576 = vpop.f32.mrb[0].mxu0
      %v577 = vadd.f32 0.0, %v576
      %v578 = vpop.f32.mrb[0].mxu0
      %579 = vmatprep.mubr.f32.mxu0 0.0
      %580 = vmatmul.mubr.f32.gmra.mrb[0].mxu0 %v452
      %v581 = vpop.f32.mrb[0].mxu0
      %v582 = vadd.f32 0.0, %v581
      %v583 = vpop.f32.mrb[0].mxu0
      %584 = vmatprep.mubr.f32.mxu0 0.0
      %585 = vmatmul.mubr.f32.gmra.mrb[0].mxu0 %v455
      %v586 = vpop.f32.mrb[0].mxu0
      %v587 = vadd.f32 0.0, %v586
      %v588 = vpop.f32.mrb[0].mxu0
      %589 = vmatprep.mubr.f32.mxu0 0.0
      %590 = vmatmul.mubr.f32.gmra.mrb[0].mxu0 %v458
      %v591 = vpop.f32.mrb[0].mxu0
      %v592 = vadd.f32 0.0, %v591
      %v593 = vpop.f32.mrb[0].mxu0
      %594 = vmatprep.mubr.f32.mxu0 0.0
      %595 = vmatmul.mubr.f32.gmra.mrb[0].mxu0 %v461
      %v596 = vpop.f32.mrb[0].mxu0
      %v597 = vadd.f32 0.0, %v596
      %v598 = vpop.f32.mrb[0].mxu0
      %599 = vmatprep.mubr.f32.mxu0 0.0
      %600 = vmatmul.mubr.f32.gmra.mrb[0].mxu0 %v464
      %v601 = vpop.f32.mrb[0].mxu0
      %v602 = vadd.f32 0.0, %v601
      %v603 = vpop.f32.mrb[0].mxu0
      %604 = vmatprep.mubr.f32.mxu0 0.0
      %605 = vmatmul.mubr.f32.gmra.mrb[0].mxu0 %v467
      %v606 = vpop.f32.mrb[0].mxu0
      %v607 = vadd.f32 0.0, %v606
      %v608 = vpop.f32.mrb[0].mxu0
      %609 = vmatprep.mubr.f32.mxu0 0.0
      %610 = vmatmul.mubr.f32.gmra.mrb[0].mxu0 %v470
      %v611 = vpop.f32.mrb[0].mxu0
      %v612 = vadd.f32 0.0, %v611
      %v613 = vpop.f32.mrb[0].mxu0
      %614 = vmatprep.mubr.f32.mxu0 0.0
      %615 = vmatmul.mubr.f32.gmra.mrb[0].mxu0 %v473
      %v616 = vpop.f32.mrb[0].mxu0
      %v617 = vadd.f32 0.0, %v616
      %v618 = vpop.f32.mrb[0].mxu0
      %619 = vmatprep.mubr.f32.mxu0 0.0
      %620 = vmatmul.mubr.f32.gmra.mrb[0].mxu0 %v476
      %v621 = vpop.f32.mrb[0].mxu0
      %v622 = vadd.f32 0.0, %v621
      %v623 = vpop.f32.mrb[0].mxu0
      %624 = vmatprep.mubr.f32.mxu0 0.0
      %625 = vmatmul.mubr.f32.gmra.mrb[0].mxu0 %v479
      %v626 = vpop.f32.mrb[0].mxu0
      %v627 = vadd.f32 0.0, %v626
      %v628 = vpop.f32.mrb[0].mxu0
      %629 = vdwg.mxu0
      %v646 = vunpack.c.l.b16 %v395
      %v647 = vunpack.c.l.b16 %v396
      %v648 = vunpack.c.l.b16 %v397
      %v649 = vunpack.c.l.b16 %v398
      %v650 = vunpack.c.l.b16 %v399
      %v651 = vunpack.c.l.b16 %v400
      %v652 = vunpack.c.l.b16 %v401
      %v653 = vunpack.c.l.b16 %v402
      %v654 = vunpack.c.l.b16 %v403
      %v655 = vunpack.c.l.b16 %v404
      %v656 = vunpack.c.l.b16 %v405
      %v657 = vunpack.c.l.b16 %v406
      %v658 = vunpack.c.l.b16 %v407
      %v659 = vunpack.c.l.b16 %v408
      %v660 = vunpack.c.l.b16 %v409
      %v661 = vunpack.c.l.b16 %v410
      %v662 = vpack.c.b16 %v647, %v646
      %v663 = vpack.c.b16 %v649, %v648
      %v664 = vpack.c.b16 %v651, %v650
      %v665 = vpack.c.b16 %v653, %v652
      %v666 = vpack.c.b16 %v655, %v654
      %v667 = vpack.c.b16 %v657, %v656
      %v668 = vpack.c.b16 %v659, %v658
      %v669 = vpack.c.b16 %v661, %v660
      %v674 = vunpack.c.l.b16 %v411
      %v675 = vunpack.c.l.b16 %v412
      %v676 = vunpack.c.l.b16 %v413
      %v677 = vunpack.c.l.b16 %v414
      %v678 = vpack.c.b16 %v675, %v674
      %v679 = vpack.c.b16 %v677, %v676
      %vm682 = vcmask 261120
      %v684 = vsel %vm682, %v662, 0
      %v687 = vsel %vm682, %v663, 0
      %v690 = vsel %vm682, %v664, 0
      %v693 = vsel %vm682, %v665, 0
      %v696 = vsel %vm682, %v666, 0
      %v699 = vsel %vm682, %v667, 0
      %v702 = vsel %vm682, %v668, 0
      %v705 = vsel %vm682, %v669, 0
      %707 = vmatprep.subr.bf16.mxu0 0
      %708 = vmatpush1.bf16.msra.mxu0 %v678
      %709 = vmatprep.subr.bf16.mxu0 0
      %710 = vmatpush1.bf16.msra.mxu0 %v679
      %711 = vmatprep.subr.bf16.mxu0 0
      %712 = vmatpush1.bf16.msra.mxu0 0
      %713 = vmatprep.subr.bf16.mxu0 0
      %714 = vmatpush1.bf16.msra.mxu0 0
      %715 = vmatprep.subr.bf16.mxu0 0
      %716 = vmatpush1.bf16.msra.mxu0 0
      %717 = vmatprep.subr.bf16.mxu0 0
      %718 = vmatpush1.bf16.msra.mxu0 0
      %719 = vmatprep.subr.bf16.mxu0 0
      %720 = vmatpush1.bf16.msra.mxu0 0
      %721 = vmatprep.subr.bf16.mxu0 0
      %722 = vmatpush1.bf16.msra.mxu0 0
      %723 = vmatprep.subr.bf16.mxu0 0
      %724 = vmatpush1.bf16.msra.mxu0 0
      %725 = vmatprep.subr.bf16.mxu0 0
      %726 = vmatpush1.bf16.msra.mxu0 0
      %727 = vmatprep.subr.bf16.mxu0 0
      %728 = vmatpush1.bf16.msra.mxu0 0
      %729 = vmatprep.subr.bf16.mxu0 0
      %730 = vmatpush1.bf16.msra.mxu0 0
      %731 = vmatprep.subr.bf16.mxu0 0
      %732 = vmatpush1.bf16.msra.mxu0 0
      %733 = vmatprep.subr.bf16.mxu0 0
      %734 = vmatpush1.bf16.msra.mxu0 0
      %735 = vmatprep.subr.bf16.mxu0 0
      %736 = vmatpush1.bf16.msra.mxu0 0
      %737 = vmatprep.subr.bf16.mxu0 0
      %738 = vmatpush1.bf16.msra.mxu0 0
      %739 = vmatprep.mubr.bf16.mxu0 0
      %740 = vmatmul.mubr.bf16.gmra.mrb[0].mxu0 %v684
      %v741 = vpop.f32.mrb[0].mxu0
      %v742 = vadd.f32 %v552, %v741
      %v743 = vpop.f32.mrb[0].mxu0
      %v744 = vpop.f32.mrb[0].mxu0
      %v745 = vadd.f32 %v557, %v744
      %v746 = vpop.f32.mrb[0].mxu0
      %747 = vmatprep.mubr.bf16.mxu0 0
      %748 = vmatmul.mubr.bf16.gmra.mrb[0].mxu0 %v687
      %v749 = vpop.f32.mrb[0].mxu0
      %v750 = vadd.f32 %v562, %v749
      %v751 = vpop.f32.mrb[0].mxu0
      %v752 = vpop.f32.mrb[0].mxu0
      %v753 = vadd.f32 %v567, %v752
      %v754 = vpop.f32.mrb[0].mxu0
      %755 = vmatprep.mubr.bf16.mxu0 0
      %756 = vmatmul.mubr.bf16.gmra.mrb[0].mxu0 %v690
      %v757 = vpop.f32.mrb[0].mxu0
      %v758 = vadd.f32 %v572, %v757
      %v759 = vpop.f32.mrb[0].mxu0
      %v760 = vpop.f32.mrb[0].mxu0
      %v761 = vadd.f32 %v577, %v760
      %v762 = vpop.f32.mrb[0].mxu0
      %763 = vmatprep.mubr.bf16.mxu0 0
      %764 = vmatmul.mubr.bf16.gmra.mrb[0].mxu0 %v693
      %v765 = vpop.f32.mrb[0].mxu0
      %v766 = vadd.f32 %v582, %v765
      %v767 = vpop.f32.mrb[0].mxu0
      %v768 = vpop.f32.mrb[0].mxu0
      %v769 = vadd.f32 %v587, %v768
      %v770 = vpop.f32.mrb[0].mxu0
      %771 = vmatprep.mubr.bf16.mxu0 0
      %772 = vmatmul.mubr.bf16.gmra.mrb[0].mxu0 %v696
      %v773 = vpop.f32.mrb[0].mxu0
      %v774 = vadd.f32 %v592, %v773
      %v775 = vpop.f32.mrb[0].mxu0
      %v776 = vpop.f32.mrb[0].mxu0
      %v777 = vadd.f32 %v597, %v776
      %v778 = vpop.f32.mrb[0].mxu0
      %779 = vmatprep.mubr.bf16.mxu0 0
      %780 = vmatmul.mubr.bf16.gmra.mrb[0].mxu0 %v699
      %v781 = vpop.f32.mrb[0].mxu0
      %v782 = vadd.f32 %v602, %v781
      %v783 = vpop.f32.mrb[0].mxu0
      %v784 = vpop.f32.mrb[0].mxu0
      %v785 = vadd.f32 %v607, %v784
      %v786 = vpop.f32.mrb[0].mxu0
      %787 = vmatprep.mubr.bf16.mxu0 0
      %788 = vmatmul.mubr.bf16.gmra.mrb[0].mxu0 %v702
      %v789 = vpop.f32.mrb[0].mxu0
      %v790 = vadd.f32 %v612, %v789
      %v791 = vpop.f32.mrb[0].mxu0
      %v792 = vpop.f32.mrb[0].mxu0
      %v793 = vadd.f32 %v617, %v792
      %v794 = vpop.f32.mrb[0].mxu0
      %795 = vmatprep.mubr.bf16.mxu0 0
      %796 = vmatmul.mubr.bf16.gmra.mrb[0].mxu0 %v705
      %v797 = vpop.f32.mrb[0].mxu0
      %v798 = vadd.f32 %v622, %v797
      %v799 = vpop.f32.mrb[0].mxu0
      %v800 = vpop.f32.mrb[0].mxu0
      %v801 = vadd.f32 %v627, %v800
      %v802 = vpop.f32.mrb[0].mxu0
      %803 = vdwg.mxu0
      %v804 = vld [vmem:[%s4] sm:$0x1]
      %v806 = vlaneseq
      %v807 = vshrl.u32 %v806, 7
      %v808 = vsub.s32 0, %v807
      %v809 = vrot.slane %v804, %v808
      %v811 = vadd.f32 %v742, %v809
      %v812 = vadd.f32 %v745, %v809
      %v813 = vadd.f32 %v750, %v809
      %v814 = vadd.f32 %v753, %v809
      %v815 = vadd.f32 %v758, %v809
      %v816 = vadd.f32 %v761, %v809
      %v817 = vadd.f32 %v766, %v809
      %v818 = vadd.f32 %v769, %v809
      %v819 = vadd.f32 %v774, %v809
      %v820 = vadd.f32 %v777, %v809
      %v821 = vadd.f32 %v782, %v809
      %v822 = vadd.f32 %v785, %v809
      %v823 = vadd.f32 %v790, %v809
      %v824 = vadd.f32 %v793, %v809
      %v825 = vadd.f32 %v798, %v809
      %v826 = vadd.f32 %v801, %v809
      %v827 = vmax.f32 %v811, 0.0
      %v828 = vmax.f32 %v812, 0.0
      %v829 = vmax.f32 %v813, 0.0
      %v830 = vmax.f32 %v814, 0.0
      %v831 = vmax.f32 %v815, 0.0
      %v832 = vmax.f32 %v816, 0.0
      %v833 = vmax.f32 %v817, 0.0
      %v834 = vmax.f32 %v818, 0.0
      %v835 = vmax.f32 %v819, 0.0
      %v836 = vmax.f32 %v820, 0.0
      %v837 = vmax.f32 %v821, 0.0
      %v838 = vmax.f32 %v822, 0.0
      %v839 = vmax.f32 %v823, 0.0
      %v840 = vmax.f32 %v824, 0.0
      %v841 = vmax.f32 %v825, 0.0
      %v842 = vmax.f32 %v826, 0.0
      %v843 = vpack.c.bf16 %v828, %v827
      %v844 = vpack.c.bf16 %v830, %v829
      %v845 = vpack.c.bf16 %v832, %v831
      %v846 = vpack.c.bf16 %v834, %v833
      %v847 = vpack.c.bf16 %v836, %v835
      %v848 = vpack.c.bf16 %v838, %v837
      %v849 = vpack.c.bf16 %v840, %v839
      %v850 = vpack.c.bf16 %v842, %v841
      %v851 = vld [vmem:[%s5] sm:$0xf]
      %v852 = vld [vmem:[%s5 + $0x4] sm:$0xf]
      %v853 = vld [vmem:[%s5 + $0x8] sm:$0xf]
      %v854 = vld [vmem:[%s5 + $0xc] sm:$0xf]
      %v855 = vld [vmem:[%s6] sm:$0x1]
      %v857 = vlaneseq
      %v858 = vshrl.u32 %v857, 7
      %v859 = vsub.s32 0, %v858
      %v860 = vrot.slane %v855, %v859
      %v866 = vunpack.c.l.b16 %v851
      %v867 = vunpack.c.l.b16 %v852
      %v868 = vunpack.c.l.b16 %v853
      %v869 = vunpack.c.l.b16 %v854
      %v870 = vpack.c.b16 %v867, %v866
      %v871 = vpack.c.b16 %v869, %v868
      %v875 = vsel %vm682, %v843, 0
      %v878 = vsel %vm682, %v844, 0
      %v881 = vsel %vm682, %v845, 0
      %v884 = vsel %vm682, %v846, 0
      %v887 = vsel %vm682, %v847, 0
      %v890 = vsel %vm682, %v848, 0
      %v893 = vsel %vm682, %v849, 0
      %v896 = vsel %vm682, %v850, 0
      %898 = vmatprep.subr.bf16.mxu0 0
      %899 = vmatpush1.bf16.msra.mxu0 %v870
      %900 = vmatprep.subr.bf16.mxu0 0
      %901 = vmatpush1.bf16.msra.mxu0 %v871
      %902 = vmatprep.subr.bf16.mxu0 0
      %903 = vmatpush1.bf16.msra.mxu0 0
      %904 = vmatprep.subr.bf16.mxu0 0
      %905 = vmatpush1.bf16.msra.mxu0 0
      %906 = vmatprep.subr.bf16.mxu0 0
      %907 = vmatpush1.bf16.msra.mxu0 0
      %908 = vmatprep.subr.bf16.mxu0 0
      %909 = vmatpush1.bf16.msra.mxu0 0
      %910 = vmatprep.subr.bf16.mxu0 0
      %911 = vmatpush1.bf16.msra.mxu0 0
      %912 = vmatprep.subr.bf16.mxu0 0
      %913 = vmatpush1.bf16.msra.mxu0 0
      %914 = vmatprep.subr.bf16.mxu0 0
      %915 = vmatpush1.bf16.msra.mxu0 0
      %916 = vmatprep.subr.bf16.mxu0 0
      %917 = vmatpush1.bf16.msra.mxu0 0
      %918 = vmatprep.subr.bf16.mxu0 0
      %919 = vmatpush1.bf16.msra.mxu0 0
      %920 = vmatprep.subr.bf16.mxu0 0
      %921 = vmatpush1.bf16.msra.mxu0 0
      %922 = vmatprep.subr.bf16.mxu0 0
      %923 = vmatpush1.bf16.msra.mxu0 0
      %924 = vmatprep.subr.bf16.mxu0 0
      %925 = vmatpush1.bf16.msra.mxu0 0
      %926 = vmatprep.subr.bf16.mxu0 0
      %927 = vmatpush1.bf16.msra.mxu0 0
      %928 = vmatprep.subr.bf16.mxu0 0
      %929 = vmatpush1.bf16.msra.mxu0 0
      %930 = vmatprep.mubr.bf16.mxu0 0
      %931 = vmatmul.mubr.bf16.gmra.mrb[0].mxu0 %v875
      %v932 = vpop.f32.mrb[0].mxu0
      %v933 = vadd.f32 %v860, %v932
      %v934 = vpop.f32.mrb[0].mxu0
      %v935 = vpop.f32.mrb[0].mxu0
      %v936 = vadd.f32 %v860, %v935
      %v937 = vpop.f32.mrb[0].mxu0
      %938 = vmatprep.mubr.bf16.mxu0 0
      %939 = vmatmul.mubr.bf16.gmra.mrb[0].mxu0 %v878
      %v940 = vpop.f32.mrb[0].mxu0
      %v941 = vadd.f32 %v860, %v940
      %v942 = vpop.f32.mrb[0].mxu0
      %v943 = vpop.f32.mrb[0].mxu0
      %v944 = vadd.f32 %v860, %v943
      %v945 = vpop.f32.mrb[0].mxu0
      %946 = vmatprep.mubr.bf16.mxu0 0
      %947 = vmatmul.mubr.bf16.gmra.mrb[0].mxu0 %v881
      %v948 = vpop.f32.mrb[0].mxu0
      %v949 = vadd.f32 %v860, %v948
      %v950 = vpop.f32.mrb[0].mxu0
      %v951 = vpop.f32.mrb[0].mxu0
      %v952 = vadd.f32 %v860, %v951
      %v953 = vpop.f32.mrb[0].mxu0
      %954 = vmatprep.mubr.bf16.mxu0 0
      %955 = vmatmul.mubr.bf16.gmra.mrb[0].mxu0 %v884
      %v956 = vpop.f32.mrb[0].mxu0
      %v957 = vadd.f32 %v860, %v956
      %v958 = vpop.f32.mrb[0].mxu0
      %v959 = vpop.f32.mrb[0].mxu0
      %v960 = vadd.f32 %v860, %v959
      %v961 = vpop.f32.mrb[0].mxu0
      %962 = vmatprep.mubr.bf16.mxu0 0
      %963 = vmatmul.mubr.bf16.gmra.mrb[0].mxu0 %v887
      %v964 = vpop.f32.mrb[0].mxu0
      %v965 = vadd.f32 %v860, %v964
      %v966 = vpop.f32.mrb[0].mxu0
      %v967 = vpop.f32.mrb[0].mxu0
      %v968 = vadd.f32 %v860, %v967
      %v969 = vpop.f32.mrb[0].mxu0
      %970 = vmatprep.mubr.bf16.mxu0 0
      %971 = vmatmul.mubr.bf16.gmra.mrb[0].mxu0 %v890
      %v972 = vpop.f32.mrb[0].mxu0
      %v973 = vadd.f32 %v860, %v972
      %v974 = vpop.f32.mrb[0].mxu0
      %v975 = vpop.f32.mrb[0].mxu0
      %v976 = vadd.f32 %v860, %v975
      %v977 = vpop.f32.mrb[0].mxu0
      %978 = vmatprep.mubr.bf16.mxu0 0
      %979 = vmatmul.mubr.bf16.gmra.mrb[0].mxu0 %v893
      %v980 = vpop.f32.mrb[0].mxu0
      %v981 = vadd.f32 %v860, %v980
      %v982 = vpop.f32.mrb[0].mxu0
      %v983 = vpop.f32.mrb[0].mxu0
      %v984 = vadd.f32 %v860, %v983
      %v985 = vpop.f32.mrb[0].mxu0
      %986 = vmatprep.mubr.bf16.mxu0 0
      %987 = vmatmul.mubr.bf16.gmra.mrb[0].mxu0 %v896
      %v988 = vpop.f32.mrb[0].mxu0
      %v989 = vadd.f32 %v860, %v988
      %v990 = vpop.f32.mrb[0].mxu0
      %v991 = vpop.f32.mrb[0].mxu0
      %v992 = vadd.f32 %v860, %v991
      %v993 = vpop.f32.mrb[0].mxu0
      %994 = vdwg.mxu0
      %v995 = vmax.f32 %v933, 0.0
      %v996 = vmax.f32 %v936, 0.0
      %v997 = vmax.f32 %v941, 0.0
      %v998 = vmax.f32 %v944, 0.0
      %v999 = vmax.f32 %v949, 0.0
      %v1000 = vmax.f32 %v952, 0.0
      %v1001 = vmax.f32 %v957, 0.0
      %v1002 = vmax.f32 %v960, 0.0
      %v1003 = vmax.f32 %v965, 0.0
      %v1004 = vmax.f32 %v968, 0.0
      %v1005 = vmax.f32 %v973, 0.0
      %v1006 = vmax.f32 %v976, 0.0
      %v1007 = vmax.f32 %v981, 0.0
      %v1008 = vmax.f32 %v984, 0.0
      %v1009 = vmax.f32 %v989, 0.0
      %v1010 = vmax.f32 %v992, 0.0
      %v1011 = vpack.c.bf16 %v996, %v995
      %v1012 = vpack.c.bf16 %v998, %v997
      %v1013 = vpack.c.bf16 %v1000, %v999
      %v1014 = vpack.c.bf16 %v1002, %v1001
      %v1015 = vpack.c.bf16 %v1004, %v1003
      %v1016 = vpack.c.bf16 %v1006, %v1005
      %v1017 = vpack.c.bf16 %v1008, %v1007
      %v1018 = vpack.c.bf16 %v1010, %v1009
      %v1019 = vld [vmem:[%s7] sm:$0xf]
      %v1020 = vld [vmem:[%s7 + $0x4] sm:$0xf]
      %v1021 = vld [vmem:[%s7 + $0x8] sm:$0xf]
      %v1022 = vld [vmem:[%s7 + $0xc] sm:$0xf]
      %v1023 = vld [vmem:[%s8] sm:$0x1]
      %v1025 = vlaneseq
      %v1026 = vshrl.u32 %v1025, 7
      %v1027 = vsub.s32 0, %v1026
      %v1028 = vrot.slane %v1023, %v1027
      %v1034 = vunpack.c.l.b16 %v1019
      %v1035 = vunpack.c.l.b16 %v1020
      %v1036 = vunpack.c.l.b16 %v1021
      %v1037 = vunpack.c.l.b16 %v1022
      %v1038 = vpack.c.b16 %v1035, %v1034
      %v1039 = vpack.c.b16 %v1037, %v1036
      %v1043 = vsel %vm682, %v1011, 0
      %v1046 = vsel %vm682, %v1012, 0
      %v1049 = vsel %vm682, %v1013, 0
      %v1052 = vsel %vm682, %v1014, 0
      %v1055 = vsel %vm682, %v1015, 0
      %v1058 = vsel %vm682, %v1016, 0
      %v1061 = vsel %vm682, %v1017, 0
      %v1064 = vsel %vm682, %v1018, 0
      %1066 = vmatprep.subr.bf16.mxu0 0
      %1067 = vmatpush1.bf16.msra.mxu0 %v1038
      %1068 = vmatprep.subr.bf16.mxu0 0
      %1069 = vmatpush1.bf16.msra.mxu0 %v1039
      %1070 = vmatprep.subr.bf16.mxu0 0
      %1071 = vmatpush1.bf16.msra.mxu0 0
      %1072 = vmatprep.subr.bf16.mxu0 0
      %1073 = vmatpush1.bf16.msra.mxu0 0
      %1074 = vmatprep.subr.bf16.mxu0 0
      %1075 = vmatpush1.bf16.msra.mxu0 0
      %1076 = vmatprep.subr.bf16.mxu0 0
      %1077 = vmatpush1.bf16.msra.mxu0 0
      %1078 = vmatprep.subr.bf16.mxu0 0
      %1079 = vmatpush1.bf16.msra.mxu0 0
      %1080 = vmatprep.subr.bf16.mxu0 0
      %1081 = vmatpush1.bf16.msra.mxu0 0
      %1082 = vmatprep.subr.bf16.mxu0 0
      %1083 = vmatpush1.bf16.msra.mxu0 0
      %1084 = vmatprep.subr.bf16.mxu0 0
      %1085 = vmatpush1.bf16.msra.mxu0 0
      %1086 = vmatprep.subr.bf16.mxu0 0
      %1087 = vmatpush1.bf16.msra.mxu0 0
      %1088 = vmatprep.subr.bf16.mxu0 0
      %1089 = vmatpush1.bf16.msra.mxu0 0
      %1090 = vmatprep.subr.bf16.mxu0 0
      %1091 = vmatpush1.bf16.msra.mxu0 0
      %1092 = vmatprep.subr.bf16.mxu0 0
      %1093 = vmatpush1.bf16.msra.mxu0 0
      %1094 = vmatprep.subr.bf16.mxu0 0
      %1095 = vmatpush1.bf16.msra.mxu0 0
      %1096 = vmatprep.subr.bf16.mxu0 0
      %1097 = vmatpush1.bf16.msra.mxu0 0
      %1098 = vmatprep.mubr.bf16.mxu0 0
      %1099 = vmatmul.mubr.bf16.gmra.mrb[0].mxu0 %v1043
      %v1100 = vpop.f32.mrb[0].mxu0
      %v1101 = vadd.f32 %v1028, %v1100
      %v1102 = vpop.f32.mrb[0].mxu0
      %v1103 = vpop.f32.mrb[0].mxu0
      %v1104 = vadd.f32 %v1028, %v1103
      %v1105 = vpop.f32.mrb[0].mxu0
      %1106 = vmatprep.mubr.bf16.mxu0 0
      %1107 = vmatmul.mubr.bf16.gmra.mrb[0].mxu0 %v1046
      %v1108 = vpop.f32.mrb[0].mxu0
      %v1109 = vadd.f32 %v1028, %v1108
      %v1110 = vpop.f32.mrb[0].mxu0
      %v1111 = vpop.f32.mrb[0].mxu0
      %v1112 = vadd.f32 %v1028, %v1111
      %v1113 = vpop.f32.mrb[0].mxu0
      %1114 = vmatprep.mubr.bf16.mxu0 0
      %1115 = vmatmul.mubr.bf16.gmra.mrb[0].mxu0 %v1049
      %v1116 = vpop.f32.mrb[0].mxu0
      %v1117 = vadd.f32 %v1028, %v1116
      %v1118 = vpop.f32.mrb[0].mxu0
      %v1119 = vpop.f32.mrb[0].mxu0
      %v1120 = vadd.f32 %v1028, %v1119
      %v1121 = vpop.f32.mrb[0].mxu0
      %1122 = vmatprep.mubr.bf16.mxu0 0
      %1123 = vmatmul.mubr.bf16.gmra.mrb[0].mxu0 %v1052
      %v1124 = vpop.f32.mrb[0].mxu0
      %v1125 = vadd.f32 %v1028, %v1124
      %v1126 = vpop.f32.mrb[0].mxu0
      %v1127 = vpop.f32.mrb[0].mxu0
      %v1128 = vadd.f32 %v1028, %v1127
      %v1129 = vpop.f32.mrb[0].mxu0
      %1130 = vmatprep.mubr.bf16.mxu0 0
      %1131 = vmatmul.mubr.bf16.gmra.mrb[0].mxu0 %v1055
      %v1132 = vpop.f32.mrb[0].mxu0
      %v1133 = vadd.f32 %v1028, %v1132
      %v1134 = vpop.f32.mrb[0].mxu0
      %v1135 = vpop.f32.mrb[0].mxu0
      %v1136 = vadd.f32 %v1028, %v1135
      %v1137 = vpop.f32.mrb[0].mxu0
      %1138 = vmatprep.mubr.bf16.mxu0 0
      %1139 = vmatmul.mubr.bf16.gmra.mrb[0].mxu0 %v1058
      %v1140 = vpop.f32.mrb[0].mxu0
      %v1141 = vadd.f32 %v1028, %v1140
      %v1142 = vpop.f32.mrb[0].mxu0
      %v1143 = vpop.f32.mrb[0].mxu0
      %v1144 = vadd.f32 %v1028, %v1143
      %v1145 = vpop.f32.mrb[0].mxu0
      %1146 = vmatprep.mubr.bf16.mxu0 0
      %1147 = vmatmul.mubr.bf16.gmra.mrb[0].mxu0 %v1061
      %v1148 = vpop.f32.mrb[0].mxu0
      %v1149 = vadd.f32 %v1028, %v1148
      %v1150 = vpop.f32.mrb[0].mxu0
      %v1151 = vpop.f32.mrb[0].mxu0
      %v1152 = vadd.f32 %v1028, %v1151
      %v1153 = vpop.f32.mrb[0].mxu0
      %1154 = vmatprep.mubr.bf16.mxu0 0
      %1155 = vmatmul.mubr.bf16.gmra.mrb[0].mxu0 %v1064
      %v1156 = vpop.f32.mrb[0].mxu0
      %v1157 = vadd.f32 %v1028, %v1156
      %v1158 = vpop.f32.mrb[0].mxu0
      %v1159 = vpop.f32.mrb[0].mxu0
      %v1160 = vadd.f32 %v1028, %v1159
      %v1161 = vpop.f32.mrb[0].mxu0
      %1162 = vdwg.mxu0
      %v1163 = vlaneseq
      %v1164 = vand.u32 %v1163, 127
      %vm1165 = vcmp.lt.s32.totalorder %v1164, 4
      %v1166 = vxor.u32 %v1101, 2147483648
      %v1167 = vxor.u32 %v1104, 2147483648
      %v1168 = vxor.u32 %v1109, 2147483648
      %v1169 = vxor.u32 %v1112, 2147483648
      %v1170 = vxor.u32 %v1117, 2147483648
      %v1171 = vxor.u32 %v1120, 2147483648
      %v1172 = vxor.u32 %v1125, 2147483648
      %v1173 = vxor.u32 %v1128, 2147483648
      %v1174 = vxor.u32 %v1133, 2147483648
      %v1175 = vxor.u32 %v1136, 2147483648
      %v1176 = vxor.u32 %v1141, 2147483648
      %v1177 = vxor.u32 %v1144, 2147483648
      %v1178 = vxor.u32 %v1149, 2147483648
      %v1179 = vxor.u32 %v1152, 2147483648
      %v1180 = vxor.u32 %v1157, 2147483648
      %v1181 = vxor.u32 %v1160, 2147483648
      %v1182 = vmul.f32 %v1166, 1.442695
      %v1183 = vpow.pop %v1182
      %v1184 = vmul.f32 %v1167, 1.442695
      %v1185 = vpow.pop %v1184
      %v1186 = vmul.f32 %v1168, 1.442695
      %v1187 = vpow.pop %v1186
      %v1188 = vmul.f32 %v1169, 1.442695
      %v1189 = vpow.pop %v1188
      %v1190 = vmul.f32 %v1170, 1.442695
      %v1191 = vpow.pop %v1190
      %v1192 = vmul.f32 %v1171, 1.442695
      %v1193 = vpow.pop %v1192
      %v1194 = vmul.f32 %v1172, 1.442695
      %v1195 = vpow.pop %v1194
      %v1196 = vmul.f32 %v1173, 1.442695
      %v1197 = vpow.pop %v1196
      %v1198 = vmul.f32 %v1174, 1.442695
      %v1199 = vpow.pop %v1198
      %v1200 = vmul.f32 %v1175, 1.442695
      %v1201 = vpow.pop %v1200
      %v1202 = vmul.f32 %v1176, 1.442695
      %v1203 = vpow.pop %v1202
      %v1204 = vmul.f32 %v1177, 1.442695
      %v1205 = vpow.pop %v1204
      %v1206 = vmul.f32 %v1178, 1.442695
      %v1207 = vpow.pop %v1206
      %v1208 = vmul.f32 %v1179, 1.442695
      %v1209 = vpow.pop %v1208
      %v1210 = vmul.f32 %v1180, 1.442695
      %v1211 = vpow.pop %v1210
      %v1212 = vmul.f32 %v1181, 1.442695
      %v1213 = vpow.pop %v1212
      %v1214 = vadd.f32 %v1183, 1.0
      %v1215 = vadd.f32 %v1185, 1.0
      %v1216 = vadd.f32 %v1187, 1.0
      %v1217 = vadd.f32 %v1189, 1.0
      %v1218 = vadd.f32 %v1191, 1.0
      %v1219 = vadd.f32 %v1193, 1.0
      %v1220 = vadd.f32 %v1195, 1.0
      %v1221 = vadd.f32 %v1197, 1.0
      %v1222 = vadd.f32 %v1199, 1.0
      %v1223 = vadd.f32 %v1201, 1.0
      %v1224 = vadd.f32 %v1203, 1.0
      %v1225 = vadd.f32 %v1205, 1.0
      %v1226 = vadd.f32 %v1207, 1.0
      %v1227 = vadd.f32 %v1209, 1.0
      %v1228 = vadd.f32 %v1211, 1.0
      %v1229 = vadd.f32 %v1213, 1.0
      %v1230 = vrcp.pop %v1214
      %v1231 = vmul.f32 1.0, %v1230
      %v1232 = vrcp.pop %v1215
      %v1233 = vmul.f32 1.0, %v1232
      %v1234 = vrcp.pop %v1216
      %v1235 = vmul.f32 1.0, %v1234
      %v1236 = vrcp.pop %v1217
      %v1237 = vmul.f32 1.0, %v1236
      %v1238 = vrcp.pop %v1218
      %v1239 = vmul.f32 1.0, %v1238
      %v1240 = vrcp.pop %v1219
      %v1241 = vmul.f32 1.0, %v1240
      %v1242 = vrcp.pop %v1220
      %v1243 = vmul.f32 1.0, %v1242
      %v1244 = vrcp.pop %v1221
      %v1245 = vmul.f32 1.0, %v1244
      %v1246 = vrcp.pop %v1222
      %v1247 = vmul.f32 1.0, %v1246
      %v1248 = vrcp.pop %v1223
      %v1249 = vmul.f32 1.0, %v1248
      %v1250 = vrcp.pop %v1224
      %v1251 = vmul.f32 1.0, %v1250
      %v1252 = vrcp.pop %v1225
      %v1253 = vmul.f32 1.0, %v1252
      %v1254 = vrcp.pop %v1226
      %v1255 = vmul.f32 1.0, %v1254
      %v1256 = vrcp.pop %v1227
      %v1257 = vmul.f32 1.0, %v1256
      %v1258 = vrcp.pop %v1228
      %v1259 = vmul.f32 1.0, %v1258
      %v1260 = vrcp.pop %v1229
      %v1261 = vmul.f32 1.0, %v1260
      %v1262 = vsel %vm1165, %v1231, %v1101
      %v1263 = vsel %vm1165, %v1233, %v1104
      %v1264 = vsel %vm1165, %v1235, %v1109
      %v1265 = vsel %vm1165, %v1237, %v1112
      %v1266 = vsel %vm1165, %v1239, %v1117
      %v1267 = vsel %vm1165, %v1241, %v1120
      %v1268 = vsel %vm1165, %v1243, %v1125
      %v1269 = vsel %vm1165, %v1245, %v1128
      %v1270 = vsel %vm1165, %v1247, %v1133
      %v1271 = vsel %vm1165, %v1249, %v1136
      %v1272 = vsel %vm1165, %v1251, %v1141
      %v1273 = vsel %vm1165, %v1253, %v1144
      %v1274 = vsel %vm1165, %v1255, %v1149
      %v1275 = vsel %vm1165, %v1257, %v1152
      %v1276 = vsel %vm1165, %v1259, %v1157
      %v1277 = vsel %vm1165, %v1261, %v1160
      %vm1278 = vcmask 48128
      %1279 = vst.msk [vmem:[%s392] sm:$0xff] %vm1278, %v1262
      %1280 = vst.msk [vmem:[%s392 + $0x8] sm:$0xff] %vm1278, %v1263
      %1281 = vst.msk [vmem:[%s392 + $0x10] sm:$0xff] %vm1278, %v1264
      %1282 = vst.msk [vmem:[%s392 + $0x18] sm:$0xff] %vm1278, %v1265
      %1283 = vst.msk [vmem:[%s392 + $0x20] sm:$0xff] %vm1278, %v1266
      %1284 = vst.msk [vmem:[%s392 + $0x28] sm:$0xff] %vm1278, %v1267
      %1285 = vst.msk [vmem:[%s392 + $0x30] sm:$0xff] %vm1278, %v1268
      %1286 = vst.msk [vmem:[%s392 + $0x38] sm:$0xff] %vm1278, %v1269
      %1287 = vst.msk [vmem:[%s392 + $0x40] sm:$0xff] %vm1278, %v1270
      %1288 = vst.msk [vmem:[%s392 + $0x48] sm:$0xff] %vm1278, %v1271
      %1289 = vst.msk [vmem:[%s392 + $0x50] sm:$0xff] %vm1278, %v1272
      %1290 = vst.msk [vmem:[%s392 + $0x58] sm:$0xff] %vm1278, %v1273
      %1291 = vst.msk [vmem:[%s392 + $0x60] sm:$0xff] %vm1278, %v1274
      %1292 = vst.msk [vmem:[%s392 + $0x68] sm:$0xff] %vm1278, %v1275
      %1293 = vst.msk [vmem:[%s392 + $0x70] sm:$0xff] %vm1278, %v1276
      %1294 = vst.msk [vmem:[%s392 + $0x78] sm:$0xff] %vm1278, %v1277
      %s1295 = smul.u32 16, %s24
      %p1296 = scmp.lt.s32.totalorder %s25, 1
      %s1297 = scalar_select %p1296, %s25, 1
      %p1298 = scmp.lt.s32.totalorder %s1295, 31
      %s1299 = scalar_select %p1298, %s1295, 31
      %s1300 = smul.addr %s1297, 32
      %s1301 = sadd.s32 %s1299, %s1300
      %s1302 = smul.addr %s1301, 8
      %s1303 = scalar_lea.vmem %s9, %s1302
      // Predicated region
      $region57: #{scab_upsample_forward.2} parent=55 // pred_check
        %p1304 = pneg %p253
      $region58: #{scab_upsample_forward.2} parent=55 // pred_check_branch
        %1306 = sbr.rel (%p1304) target = $region60
      $region59: #{scab_upsample_forward.2} parent=55 // pred_region
        %s1307 = smul.u32 16, %s24
      $region60: #{scab_upsample_forward.2} parent=55 // pred_fallthru
        _
    $region56: #{scab_upsample_forward.2} parent=5 // pred_fallthru
      _
    %p1308 = scmp.le.s32.totalorder 2, %s15
    // Predicated region
    $region61: #{scab_upsample_forward.2} parent=5 // pred_check
      %p1309 = pneg %p1308
    $region62: #{scab_upsample_forward.2} parent=5 // pred_check_branch
      %1311 = sbr.rel (%p1309) target = $region64
    $region63: #{scab_upsample_forward.2} parent=5 // pred_region
      %s1312 = ssub.s32 %s15, 2
      // Predicated region
      $region65: #{scab_upsample_forward.2} parent=63 // pred_check
        %p1313 = pneg %p259
      $region66: #{scab_upsample_forward.2} parent=63 // pred_check_branch
        %1315 = sbr.rel (%p1313) target = $region68
      $region67: #{scab_upsample_forward.2} parent=63 // pred_region
        %s1316 = smul.u32 16, %s26
        %p1317 = scmp.lt.s32.totalorder %s27, 1
        %s1318 = scalar_select %p1317, %s27, 1
        %p1319 = scmp.lt.s32.totalorder %s1316, 31
        %s1320 = scalar_select %p1319, %s1316, 31
        %s1321 = smul.addr %s1318, 32
        %s1322 = sadd.s32 %s1320, %s1321
        %s1323 = smul.addr %s1322, 8
        %s1324 = scalar_lea.vmem %s9, %s1323
      $region68: #{scab_upsample_forward.2} parent=63 // pred_fallthru
        _
    $region64: #{scab_upsample_forward.2} parent=5 // pred_fallthru
      _
  $region6: #{scab_upsample_forward.2} parent=0 // loop_footer
    %s19 = sadd.s32 1, %s15
  $region7: #{scab_upsample_forward.2} parent=0 // loop_footer_branch
    %14 = sbr.rel target = $region3
  $region8: #{scab_upsample_forward.2} parent=0 // loop_exit
    _

// kernel: scab_upsample_forward.3
$region0: #{scab_upsample_forward.3}
  #allocation0 [shape = 'u32[]', space=smem, size = 0x4, offset = 0x4, fixed_abs, tag = 'smem constant byte address 0x4 - core index']
  #allocation1 [shape = 'u32[144,128]{1,0:T(1,128)}', space=vmem, size = 0x12000, scoped, tag = 'internal scratch']
  %s0 = inlined_call_operand.vmem [shape: bf16[2,256,32], index: 0, kind: input, shape index: {}]
  %s1 = inlined_call_operand.vmem [shape: f32[2,256,6], index: 1, kind: input, shape index: {}]
  %s2 = inlined_call_operand.vmem [shape: bf16[32,16], index: 2, kind: input, shape index: {}]
  %s3 = inlined_call_operand.vmem [shape: bf16[16,32], index: 3, kind: input, shape index: {}]
  %s4 = inlined_call_operand.vmem [shape: f32[4,16], index: 4, kind: input, shape index: {}]
  %s5 = inlined_call_operand.vmem [shape: f32[16,16], index: 5, kind: input, shape index: {}]
  %s6 = inlined_call_operand.vmem [shape: bf16[2,32,256], index: 6, kind: output, shape index: {}]
  %s7 = sld [smem:[#allocation0]]
  $region94: #{scab_upsample_forward.3} parent=0
    _
  %s9 = ssub.s32 1, %s7
  %s10 = scalar_select 0, %s9, %s7
  $region1: #{scab_upsample_forward.3} parent=0
    #allocation2 [shape = 'u8[16384]{0}', space=vmem, size = 0x4000, scoped, tag = 'output window, operand 0']
    loop: start=0, step=1, limit=6
    $region2: #{scab_upsample_forward.3} parent=1 // loop_pre_header
      _
    $region3: #{scab_upsample_forward.3} parent=1 // loop_header
      %s12 = sphi 0, %s16
      %p13 = scmp.ge.s32.totalorder %s12, 6
      %s19 = sphi 0, %s31
      %s20 = sphi 0, %s27
      %s21 = sphi 0, %s19
      %s22 = sphi 0, %s20
      %s23 = sphi 0, %s21
      %s24 = sphi 0, %s22
      %s36 = sphi 0, %s38
      %s39 = sphi 0, %s36
      %s40 = sphi 0, %s39
      %s56 = sphi 0, %s40
      %s64 = sphi 0, %s66
      %s67 = sphi 0, %s64
      %s68 = sphi 0, %s67
      %s84 = sphi 0, %s68
      %s88 = sphi 0, %s88
      %s90 = sphi 0, %s88
      %s91 = sphi 0, %s90
      %s105 = sphi 0, %s91
      %s109 = sphi 0, %s109
      %s111 = sphi 0, %s109
      %s112 = sphi 0, %s111
      %s126 = sphi 0, %s112
      %s130 = sphi 0, %s130
      %s132 = sphi 0, %s130
      %s133 = sphi 0, %s132
      %s147 = sphi 0, %s133
      %s151 = sphi 0, %s151
      %s153 = sphi 0, %s151
      %s154 = sphi 0, %s153
      %s168 = sphi 0, %s154
      %s176 = sphi 0, %s178
      %s179 = sphi 0, %s176
      %s180 = sphi 0, %s179
      %s196 = sphi 0, %s180
    $region4: #{scab_upsample_forward.3} parent=1 // loop_header_branch
      %15 = sbr.rel (%p13) target = $region8
    $region5: #{scab_upsample_forward.3} parent=1 // loop_body
      %s17 = ssub.s32 %s12, 1
      %s18 = ssub.s32 %s12, 2
      %s25 = sadd.s32 1, %s20
      %p26 = scmp.ge.s32.totalorder %s25, 2
      %s27 = scalar_select %p26, 0, %s25
      %s28 = sadd.s32 1, %s19
      %s29 = scalar_select %p26, %s28, %s19
      %p30 = scmp.ge.s32.totalorder %s29, 2
      %s31 = scalar_select %p30, 0, %s29
      %s32 = ssub.s32 %s20, %s27
      %s33 = ssub.s32 %s19, %s31
      %s34 = sor.u32 %s32, %s33
      %p35 = scmp.eq.s32.totalorder %s34, 0
      %s37 = sadd.s32 %s36, 1
      %s38 = scalar_select %p35, %s36, %s37
      %p41 = pneg %p35
      %p42 = scmp.eq.s32.totalorder %s12, 3
      %p43 = por %p41, %p42
      %p44 = scmp.ne.s32.totalorder %s36, %s39
      %p45 = scmp.eq.s32.totalorder %s12, 0
      %p46 = por %p44, %p45
      %p47 = scmp.ne.s32.totalorder %s36, %s39
      %p48 = scmp.eq.s32.totalorder %s17, 3
      %p49 = por %p47, %p48
      %p50 = scmp.ne.s32.totalorder %s39, %s40
      %p51 = scmp.eq.s32.totalorder %s17, 0
      %p52 = por %p50, %p51
      %p53 = scmp.ne.s32.totalorder %s39, %s40
      %p54 = scmp.eq.s32.totalorder %s18, 3
      %p55 = por %p53, %p54
      %p57 = scmp.ne.s32.totalorder %s40, %s56
      %p58 = scmp.eq.s32.totalorder %s18, 0
      %p59 = por %p57, %p58
      %s60 = ssub.s32 %s20, %s27
      %s61 = ssub.s32 %s19, %s31
      %s62 = sor.u32 %s60, %s61
      %p63 = scmp.eq.s32.totalorder %s62, 0
      %s65 = sadd.s32 %s64, 1
      %s66 = scalar_select %p63, %s64, %s65
      %p69 = pneg %p63
      %p70 = scmp.eq.s32.totalorder %s12, 3
      %p71 = por %p69, %p70
      %p72 = scmp.ne.s32.totalorder %s64, %s67
      %p73 = scmp.eq.s32.totalorder %s12, 0
      %p74 = por %p72, %p73
      %p75 = scmp.ne.s32.totalorder %s64, %s67
      %p76 = scmp.eq.s32.totalorder %s17, 3
      %p77 = por %p75, %p76
      %p78 = scmp.ne.s32.totalorder %s67, %s68
      %p79 = scmp.eq.s32.totalorder %s17, 0
      %p80 = por %p78, %p79
      %p81 = scmp.ne.s32.totalorder %s67, %s68
      %p82 = scmp.eq.s32.totalorder %s18, 3
      %p83 = por %p81, %p82
      %p85 = scmp.ne.s32.totalorder %s68, %s84
      %p86 = scmp.eq.s32.totalorder %s18, 0
      %p87 = por %p85, %p86
      %s89 = sadd.s32 %s88, 1
      %p92 = scmp.eq.s32.totalorder %s12, 3
      %p93 = scmp.ne.s32.totalorder %s88, %s90
      %p94 = scmp.eq.s32.totalorder %s12, 0
      %p95 = por %p93, %p94
      %p96 = scmp.ne.s32.totalorder %s88, %s90
      %p97 = scmp.eq.s32.totalorder %s17, 3
      %p98 = por %p96, %p97
      %p99 = scmp.ne.s32.totalorder %s90, %s91
      %p100 = scmp.eq.s32.totalorder %s17, 0
      %p101 = por %p99, %p100
      %p102 = scmp.ne.s32.totalorder %s90, %s91
      %p103 = scmp.eq.s32.totalorder %s18, 3
      %p104 = por %p102, %p103
      %p106 = scmp.ne.s32.totalorder %s91, %s105
      %p107 = scmp.eq.s32.totalorder %s18, 0
      %p108 = por %p106, %p107
      %s110 = sadd.s32 %s109, 1
      %p113 = scmp.eq.s32.totalorder %s12, 3
      %p114 = scmp.ne.s32.totalorder %s109, %s111
      %p115 = scmp.eq.s32.totalorder %s12, 0
      %p116 = por %p114, %p115
      %p117 = scmp.ne.s32.totalorder %s109, %s111
      %p118 = scmp.eq.s32.totalorder %s17, 3
      %p119 = por %p117, %p118
      %p120 = scmp.ne.s32.totalorder %s111, %s112
      %p121 = scmp.eq.s32.totalorder %s17, 0
      %p122 = por %p120, %p121
      %p123 = scmp.ne.s32.totalorder %s111, %s112
      %p124 = scmp.eq.s32.totalorder %s18, 3
      %p125 = por %p123, %p124
      %p127 = scmp.ne.s32.totalorder %s112, %s126
      %p128 = scmp.eq.s32.totalorder %s18, 0
      %p129 = por %p127, %p128
      %s131 = sadd.s32 %s130, 1
      %p134 = scmp.eq.s32.totalorder %s12, 3
      %p135 = scmp.ne.s32.totalorder %s130, %s132
      %p136 = scmp.eq.s32.totalorder %s12, 0
      %p137 = por %p135, %p136
      %p138 = scmp.ne.s32.totalorder %s130, %s132
      %p139 = scmp.eq.s32.totalorder %s17, 3
      %p140 = por %p138, %p139
      %p141 = scmp.ne.s32.totalorder %s132, %s133
      %p142 = scmp.eq.s32.totalorder %s17, 0
      %p143 = por %p141, %p142
      %p144 = scmp.ne.s32.totalorder %s132, %s133
      %p145 = scmp.eq.s32.totalorder %s18, 3
      %p146 = por %p144, %p145
      %p148 = scmp.ne.s32.totalorder %s133, %s147
      %p149 = scmp.eq.s32.totalorder %s18, 0
      %p150 = por %p148, %p149
      %s152 = sadd.s32 %s151, 1
      %p155 = scmp.eq.s32.totalorder %s12, 3
      %p156 = scmp.ne.s32.totalorder %s151, %s153
      %p157 = scmp.eq.s32.totalorder %s12, 0
      %p158 = por %p156, %p157
      %p159 = scmp.ne.s32.totalorder %s151, %s153
      %p160 = scmp.eq.s32.totalorder %s17, 3
      %p161 = por %p159, %p160
      %p162 = scmp.ne.s32.totalorder %s153, %s154
      %p163 = scmp.eq.s32.totalorder %s17, 0
      %p164 = por %p162, %p163
      %p165 = scmp.ne.s32.totalorder %s153, %s154
      %p166 = scmp.eq.s32.totalorder %s18, 3
      %p167 = por %p165, %p166
      %p169 = scmp.ne.s32.totalorder %s154, %s168
      %p170 = scmp.eq.s32.totalorder %s18, 0
      %p171 = por %p169, %p170
      %s172 = ssub.s32 %s20, %s27
      %s173 = ssub.s32 %s19, %s31
      %s174 = sor.u32 %s172, %s173
      %p175 = scmp.eq.s32.totalorder %s174, 0
      %s177 = sadd.s32 %s176, 1
      %s178 = scalar_select %p175, %s176, %s177
      %p181 = pneg %p175
      %p182 = scmp.eq.s32.totalorder %s12, 3
      %p183 = por %p181, %p182
      %p184 = scmp.ne.s32.totalorder %s176, %s179
      %p185 = scmp.eq.s32.totalorder %s12, 0
      %p186 = por %p184, %p185
      %p187 = scmp.ne.s32.totalorder %s176, %s179
      %p188 = scmp.eq.s32.totalorder %s17, 3
      %p189 = por %p187, %p188
      %p190 = scmp.ne.s32.totalorder %s179, %s180
      %p191 = scmp.eq.s32.totalorder %s17, 0
      %p192 = por %p190, %p191
      %p193 = scmp.ne.s32.totalorder %s179, %s180
      %p194 = scmp.eq.s32.totalorder %s18, 3
      %p195 = por %p193, %p194
      %p197 = scmp.ne.s32.totalorder %s180, %s196
      %p198 = scmp.eq.s32.totalorder %s18, 0
      %p199 = por %p197, %p198
      %p200 = scmp.le.s32.totalorder 1, %s12
      %p201 = scmp.lt.s32.totalorder %s12, 5
      %p202 = pnand %p200, %p201
      %p203 = pneg %p202
      // Predicated region
      $region9: #{scab_upsample_forward.3} parent=5 // pred_check
        _
      $region10: #{scab_upsample_forward.3} parent=5 // pred_check_branch
        %205 = sbr.rel (%p202) target = $region12
      $region11: #{scab_upsample_forward.3} parent=5 // pred_region
        %s206 = ssub.s32 %s12, 1
        // Predicated region
        $region13: #{scab_upsample_forward.3} parent=11 // pred_check
          %p207 = pneg %p101
        $region14: #{scab_upsample_forward.3} parent=11 // pred_check_branch
          %209 = sbr.rel (%p207) target = $region16
        $region15: #{scab_upsample_forward.3} parent=11 // pred_region
          _
        $region16: #{scab_upsample_forward.3} parent=11 // pred_fallthru
          _
        // Predicated region
        $region17: #{scab_upsample_forward.3} parent=11 // pred_check
          %p210 = pneg %p122
        $region18: #{scab_upsample_forward.3} parent=11 // pred_check_branch
          %212 = sbr.rel (%p210) target = $region20
        $region19: #{scab_upsample_forward.3} parent=11 // pred_region
          _
        $region20: #{scab_upsample_forward.3} parent=11 // pred_fallthru
          _
        // Predicated region
        $region21: #{scab_upsample_forward.3} parent=11 // pred_check
          %p213 = pneg %p143
        $region22: #{scab_upsample_forward.3} parent=11 // pred_check_branch
          %215 = sbr.rel (%p213) target = $region24
        $region23: #{scab_upsample_forward.3} parent=11 // pred_region
          _
        $region24: #{scab_upsample_forward.3} parent=11 // pred_fallthru
          _
        // Predicated region
        $region25: #{scab_upsample_forward.3} parent=11 // pred_check
          %p216 = pneg %p164
        $region26: #{scab_upsample_forward.3} parent=11 // pred_check_branch
          %218 = sbr.rel (%p216) target = $region28
        $region27: #{scab_upsample_forward.3} parent=11 // pred_region
          _
        $region28: #{scab_upsample_forward.3} parent=11 // pred_fallthru
          _
      $region12: #{scab_upsample_forward.3} parent=5 // pred_fallthru
        _
      %p219 = scmp.lt.s32.totalorder %s12, 4
      // Predicated region
      $region29: #{scab_upsample_forward.3} parent=5 // pred_check
        %p220 = pneg %p219
      $region30: #{scab_upsample_forward.3} parent=5 // pred_check_branch
        %222 = sbr.rel (%p220) target = $region32
      $region31: #{scab_upsample_forward.3} parent=5 // pred_region
        // Predicated region
        $region33: #{scab_upsample_forward.3} parent=31 // pred_check
          %p223 = pneg %p46
        $region34: #{scab_upsample_forward.3} parent=31 // pred_check_branch
          %225 = sbr.rel (%p223) target = $region36
        $region35: #{scab_upsample_forward.3} parent=31 // pred_region
          %s226 = smul.u32 16, %s19
          %p227 = scmp.lt.s32.totalorder %s20, 1
          %s228 = scalar_select %p227, %s20, 1
          %p229 = scmp.lt.s32.totalorder %s226, 31
          %s230 = scalar_select %p229, %s226, 31
          %s231 = smul.addr %s228, 32
          %s232 = sadd.s32 %s230, %s231
          %s233 = smul.addr %s232, 4
          %s234 = scalar_lea.vmem %s0, %s233
          %s235 = smul.u32 16, %s19
        $region36: #{scab_upsample_forward.3} parent=31 // pred_fallthru
          _
        // Predicated region
        $region37: #{scab_upsample_forward.3} parent=31 // pred_check
          %p236 = pneg %p74
        $region38: #{scab_upsample_forward.3} parent=31 // pred_check_branch
          %238 = sbr.rel (%p236) target = $region40
        $region39: #{scab_upsample_forward.3} parent=31 // pred_region
          %s239 = smul.u32 16, %s19
          %p240 = scmp.lt.s32.totalorder %s20, 1
          %s241 = scalar_select %p240, %s20, 1
          %p242 = scmp.lt.s32.totalorder %s239, 31
          %s243 = scalar_select %p242, %s239, 31
          %s244 = smul.addr %s241, 32
          %s245 = sadd.s32 %s243, %s244
          %s246 = smul.addr %s245, 8
          %s247 = scalar_lea.vmem %s1, %s246
          %s248 = smul.u32 16, %s19
        $region40: #{scab_upsample_forward.3} parent=31 // pred_fallthru
          _
      $region32: #{scab_upsample_forward.3} parent=5 // pred_fallthru
        _
      %p249 = scmp.le.s32.totalorder 1, %s12
      %p250 = scmp.lt.s32.totalorder %s12, 5
      %p251 = pnand %p249, %p250
      %p252 = pneg %p251
      // Predicated region
      $region41: #{scab_upsample_forward.3} parent=5 // pred_check
        _
      $region42: #{scab_upsample_forward.3} parent=5 // pred_check_branch
        %254 = sbr.rel (%p251) target = $region44
      $region43: #{scab_upsample_forward.3} parent=5 // pred_region
        %s255 = ssub.s32 %s12, 1
        %s256 = smul.u32 16, %s21
        %p257 = scmp.lt.s32.totalorder %s22, 1
        %s258 = scalar_select %p257, %s22, 1
        %p259 = scmp.lt.s32.totalorder %s256, 31
        %s260 = scalar_select %p259, %s256, 31
        %s261 = smul.addr %s258, 32
        %s262 = sadd.s32 %s260, %s261
        %s263 = smul.addr %s262, 4
        %s264 = scalar_lea.vmem %s0, %s263
        %p265 = pneg %p52
        %p266 = pneg %p49
        %s267 = smul.u32 16, %s21
        %p268 = scmp.lt.s32.totalorder %s22, 1
        %s269 = scalar_select %p268, %s22, 1
        %p270 = scmp.lt.s32.totalorder %s267, 31
        %s271 = scalar_select %p270, %s267, 31
        %s272 = smul.addr %s269, 32
        %s273 = sadd.s32 %s271, %s272
        %s274 = smul.addr %s273, 8
        %s275 = scalar_lea.vmem %s1, %s274
        %p276 = pneg %p80
        %p277 = pneg %p77
        %p278 = pneg %p101
        %p279 = pneg %p98
        %p280 = pneg %p122
        %p281 = pneg %p119
        %p282 = pneg %p143
        %p283 = pneg %p140
        %p284 = pneg %p164
        %p285 = pneg %p161
        %p286 = pneg %p192
        %p287 = pneg %p189
        %s288 = sand.u32 %s179, 1
        %s289 = sand.u32 %s179, 1
        %s290 = smul.addr %s289, 16
        %s291 = scalar_lea.vmem [#allocation2], %s290
        %s292 = smul.u32 16, %s21
        %p293 = scmp.lt.s32.totalorder %s22, 1
        %s294 = scalar_select %p293, %s22, 1
        %p295 = scmp.lt.s32.totalorder %s292, 31
        %s296 = scalar_select %p295, %s292, 31
        %s297 = smul.addr %s294, 32
        %s298 = sadd.s32 %s296, %s297
        %s299 = smul.addr %s298, 4
        %s300 = scalar_lea.vmem %s0, %s299
        %s301 = smul.u32 16, %s21
        %s302 = smul.u32 16, %s21
        %p303 = scmp.lt.s32.totalorder %s22, 1
        %s304 = scalar_select %p303, %s22, 1
        %p305 = scmp.lt.s32.totalorder %s302, 31
        %s306 = scalar_select %p305, %s302, 31
        %s307 = smul.addr %s304, 32
        %s308 = sadd.s32 %s306, %s307
        %s309 = smul.addr %s308, 8
        %s310 = scalar_lea.vmem %s1, %s309
        %s311 = smul.u32 16, %s21
        %v313 = vld [vmem:[%s300] sm:$0xf]
        %v314 = vld [vmem:[%s300 + $0x4] sm:$0xf]
        %v315 = vld [vmem:[%s300 + $0x8] sm:$0xf]
        %v316 = vld [vmem:[%s300 + $0xc] sm:$0xf]
        %v317 = vld [vmem:[%s300 + $0x10] sm:$0xf]
        %v318 = vld [vmem:[%s300 + $0x14] sm:$0xf]
        %v319 = vld [vmem:[%s300 + $0x18] sm:$0xf]
        %v320 = vld [vmem:[%s300 + $0x1c] sm:$0xf]
        %v321 = vld [vmem:[%s300 + $0x20] sm:$0xf]
        %v322 = vld [vmem:[%s300 + $0x24] sm:$0xf]
        %v323 = vld [vmem:[%s300 + $0x28] sm:$0xf]
        %v324 = vld [vmem:[%s300 + $0x2c] sm:$0xf]
        %v325 = vld [vmem:[%s300 + $0x30] sm:$0xf]
        %v326 = vld [vmem:[%s300 + $0x34] sm:$0xf]
        %v327 = vld [vmem:[%s300 + $0x38] sm:$0xf]
        %v328 = vld [vmem:[%s300 + $0x3c] sm:$0xf]
        %v329 = vld [vmem:[%s310] sm:$0xff]
        %v330 = vld [vmem:[%s310 + $0x8] sm:$0xff]
        %v331 = vld [vmem:[%s310 + $0x10] sm:$0xff]
        %v332 = vld [vmem:[%s310 + $0x18] sm:$0xff]
        %v333 = vld [vmem:[%s310 + $0x20] sm:$0xff]
        %v334 = vld [vmem:[%s310 + $0x28] sm:$0xff]
        %v335 = vld [vmem:[%s310 + $0x30] sm:$0xff]
        %v336 = vld [vmem:[%s310 + $0x38] sm:$0xff]
        %v337 = vld [vmem:[%s310 + $0x40] sm:$0xff]
        %v338 = vld [vmem:[%s310 + $0x48] sm:$0xff]
        %v339 = vld [vmem:[%s310 + $0x50] sm:$0xff]
        %v340 = vld [vmem:[%s310 + $0x58] sm:$0xff]
        %v341 = vld [vmem:[%s310 + $0x60] sm:$0xff]
        %v342 = vld [vmem:[%s310 + $0x68] sm:$0xff]
        %v343 = vld [vmem:[%s310 + $0x70] sm:$0xff]
        %v344 = vld [vmem:[%s310 + $0x78] sm:$0xff]
        %v345 = vld [vmem:[%s2] sm:$0xf]
        %v346 = vld [vmem:[%s2 + $0x4] sm:$0xf]
        %v347 = vld [vmem:[%s2 + $0x8] sm:$0xf]
        %v348 = vld [vmem:[%s2 + $0xc] sm:$0xf]
        %v365 = vunpack.c.l.b16 %v313
        %v366 = vunpack.c.l.b16 %v314
        %v367 = vunpack.c.l.b16 %v315
        %v368 = vunpack.c.l.b16 %v316
        %v369 = vunpack.c.l.b16 %v317
        %v370 = vunpack.c.l.b16 %v318
        %v371 = vunpack.c.l.b16 %v319
        %v372 = vunpack.c.l.b16 %v320
        %v373 = vunpack.c.l.b16 %v321
        %v374 = vunpack.c.l.b16 %v322
        %v375 = vunpack.c.l.b16 %v323
        %v376 = vunpack.c.l.b16 %v324
        %v377 = vunpack.c.l.b16 %v325
        %v378 = vunpack.c.l.b16 %v326
        %v379 = vunpack.c.l.b16 %v327
        %v380 = vunpack.c.l.b16 %v328
        %v381 = vpack.c.b16 %v366, %v365
        %v382 = vpack.c.b16 %v368, %v367
        %v383 = vpack.c.b16 %v370, %v369
        %v384 = vpack.c.b16 %v372, %v371
        %v385 = vpack.c.b16 %v374, %v373
        %v386 = vpack.c.b16 %v376, %v375
        %v387 = vpack.c.b16 %v378, %v377
        %v388 = vpack.c.b16 %v380, %v379
        %v393 = vunpack.c.l.b16 %v345
        %v394 = vunpack.c.l.b16 %v346
        %v395 = vunpack.c.l.b16 %v347
        %v396 = vunpack.c.l.b16 %v348
        %v397 = vpack.c.b16 %v394, %v393
        %v398 = vpack.c.b16 %v396, %v395
        %vm401 = vcmask 261120
        %v403 = vsel %vm401, %v381, 0
        %v406 = vsel %vm401, %v382, 0
        %v409 = vsel %vm401, %v383, 0
        %v412 = vsel %vm401, %v384, 0
        %v415 = vsel %vm401, %v385, 0
        %v418 = vsel %vm401, %v386, 0
        %v421 = vsel %vm401, %v387, 0
        %v424 = vsel %vm401, %v388, 0
        %426 = vmatprep.subr.bf16.mxu0 0
        %427 = vmatpush1.bf16.msra.mxu0 %v397
        %428 = vmatprep.subr.bf16.mxu0 0
        %429 = vmatpush1.bf16.msra.mxu0 %v398
        %430 = vmatprep.subr.bf16.mxu0 0
        %431 = vmatpush1.bf16.msra.mxu0 0
        %432 = vmatprep.subr.bf16.mxu0 0
        %433 = vmatpush1.bf16.msra.mxu0 0
        %434 = vmatprep.subr.bf16.mxu0 0
        %435 = vmatpush1.bf16.msra.mxu0 0
        %436 = vmatprep.subr.bf16.mxu0 0
        %437 = vmatpush1.bf16.msra.mxu0 0
        %438 = vmatprep.subr.bf16.mxu0 0
        %439 = vmatpush1.bf16.msra.mxu0 0
        %440 = vmatprep.subr.bf16.mxu0 0
        %441 = vmatpush1.bf16.msra.mxu0 0
        %442 = vmatprep.subr.bf16.mxu0 0
        %443 = vmatpush1.bf16.msra.mxu0 0
        %444 = vmatprep.subr.bf16.mxu0 0
        %445 = vmatpush1.bf16.msra.mxu0 0
        %446 = vmatprep.subr.bf16.mxu0 0
        %447 = vmatpush1.bf16.msra.mxu0 0
        %448 = vmatprep.subr.bf16.mxu0 0
        %449 = vmatpush1.bf16.msra.mxu0 0
        %450 = vmatprep.subr.bf16.mxu0 0
        %451 = vmatpush1.bf16.msra.mxu0 0
        %452 = vmatprep.subr.bf16.mxu0 0
        %453 = vmatpush1.bf16.msra.mxu0 0
        %454 = vmatprep.subr.bf16.mxu0 0
        %455 = vmatpush1.bf16.msra.mxu0 0
        %456 = vmatprep.subr.bf16.mxu0 0
        %457 = vmatpush1.bf16.msra.mxu0 0
        %458 = vmatprep.mubr.bf16.mxu0 0
        %459 = vmatmul.mubr.bf16.gmra.mrb[0].mxu0 %v403
        %v460 = vpop.f32.mrb[0].mxu0
        %v461 = vadd.f32 0.0, %v460
        %v462 = vpop.f32.mrb[0].mxu0
        %v463 = vpop.f32.mrb[0].mxu0
        %v464 = vadd.f32 0.0, %v463
        %v465 = vpop.f32.mrb[0].mxu0
        %466 = vmatprep.mubr.bf16.mxu0 0
        %467 = vmatmul.mubr.bf16.gmra.mrb[0].mxu0 %v406
        %v468 = vpop.f32.mrb[0].mxu0
        %v469 = vadd.f32 0.0, %v468
        %v470 = vpop.f32.mrb[0].mxu0
        %v471 = vpop.f32.mrb[0].mxu0
        %v472 = vadd.f32 0.0, %v471
        %v473 = vpop.f32.mrb[0].mxu0
        %474 = vmatprep.mubr.bf16.mxu0 0
        %475 = vmatmul.mubr.bf16.gmra.mrb[0].mxu0 %v409
        %v476 = vpop.f32.mrb[0].mxu0
        %v477 = vadd.f32 0.0, %v476
        %v478 = vpop.f32.mrb[0].mxu0
        %v479 = vpop.f32.mrb[0].mxu0
        %v480 = vadd.f32 0.0, %v479
        %v481 = vpop.f32.mrb[0].mxu0
        %482 = vmatprep.mubr.bf16.mxu0 0
        %483 = vmatmul.mubr.bf16.gmra.mrb[0].mxu0 %v412
        %v484 = vpop.f32.mrb[0].mxu0
        %v485 = vadd.f32 0.0, %v484
        %v486 = vpop.f32.mrb[0].mxu0
        %v487 = vpop.f32.mrb[0].mxu0
        %v488 = vadd.f32 0.0, %v487
        %v489 = vpop.f32.mrb[0].mxu0
        %490 = vmatprep.mubr.bf16.mxu0 0
        %491 = vmatmul.mubr.bf16.gmra.mrb[0].mxu0 %v415
        %v492 = vpop.f32.mrb[0].mxu0
        %v493 = vadd.f32 0.0, %v492
        %v494 = vpop.f32.mrb[0].mxu0
        %v495 = vpop.f32.mrb[0].mxu0
        %v496 = vadd.f32 0.0, %v495
        %v497 = vpop.f32.mrb[0].mxu0
        %498 = vmatprep.mubr.bf16.mxu0 0
        %499 = vmatmul.mubr.bf16.gmra.mrb[0].mxu0 %v418
        %v500 = vpop.f32.mrb[0].mxu0
        %v501 = vadd.f32 0.0, %v500
        %v502 = vpop.f32.mrb[0].mxu0
        %v503 = vpop.f32.mrb[0].mxu0
        %v504 = vadd.f32 0.0, %v503
        %v505 = vpop.f32.mrb[0].mxu0
        %506 = vmatprep.mubr.bf16.mxu0 0
        %507 = vmatmul.mubr.bf16.gmra.mrb[0].mxu0 %v421
        %v508 = vpop.f32.mrb[0].mxu0
        %v509 = vadd.f32 0.0, %v508
        %v510 = vpop.f32.mrb[0].mxu0
        %v511 = vpop.f32.mrb[0].mxu0
        %v512 = vadd.f32 0.0, %v511
        %v513 = vpop.f32.mrb[0].mxu0
        %514 = vmatprep.mubr.bf16.mxu0 0
        %515 = vmatmul.mubr.bf16.gmra.mrb[0].mxu0 %v424
        %v516 = vpop.f32.mrb[0].mxu0
        %v517 = vadd.f32 0.0, %v516
        %v518 = vpop.f32.mrb[0].mxu0
        %v519 = vpop.f32.mrb[0].mxu0
        %v520 = vadd.f32 0.0, %v519
        %v521 = vpop.f32.mrb[0].mxu0
        %522 = vdwg.mxu0
        %v523 = vld [vmem:[%s4] sm:$0xf]
        %vm524 = vcmask 31744
        %v526 = vsel %vm524, %v329, 0
        %v529 = vsel %vm524, %v330, 0
        %v532 = vsel %vm524, %v331, 0
        %v535 = vsel %vm524, %v332, 0
        %v538 = vsel %vm524, %v333, 0
        %v541 = vsel %vm524, %v334, 0
        %v544 = vsel %vm524, %v335, 0
        %v547 = vsel %vm524, %v336, 0
        %v550 = vsel %vm524, %v337, 0
        %v553 = vsel %vm524, %v338, 0
        %v556 = vsel %vm524, %v339, 0
        %v559 = vsel %vm524, %v340, 0
        %v562 = vsel %vm524, %v341, 0
        %v565 = vsel %vm524, %v342, 0
        %v568 = vsel %vm524, %v343, 0
        %v571 = vsel %vm524, %v344, 0
        %vm573 = vcmask 1043456
        %v575 = vsel %vm573, %v523, 0
        %577 = vmatprep.subr.mxu0 0.0
        %578 = vmatpush1.msra.mxu0 %v575
        %579 = vmatprep.subr.mxu0 0.0
        %580 = vmatpush1.msra.mxu0 0.0
        %581 = vmatprep.subr.mxu0 0.0
        %582 = vmatpush1.msra.mxu0 0.0
        %583 = vmatprep.subr.mxu0 0.0
        %584 = vmatpush1.msra.mxu0 0.0
        %585 = vmatprep.subr.mxu0 0.0
        %586 = vmatpush1.msra.mxu0 0.0
        %587 = vmatprep.subr.mxu0 0.0
        %588 = vmatpush1.msra.mxu0 0.0
        %589 = vmatprep.subr.mxu0 0.0
        %590 = vmatpush1.msra.mxu0 0.0
        %591 = vmatprep.subr.mxu0 0.0
        %592 = vmatpush1.msra.mxu0 0.0
        %593 = vmatprep.subr.mxu0 0.0
        %594 = vmatpush1.msra.mxu0 0.0
        %595 = vmatprep.subr.mxu0 0.0
        %596 = vmatpush1.msra.mxu0 0.0
        %597 = vmatprep.subr.mxu0 0.0
        %598 = vmatpush1.msra.mxu0 0.0
        %599 = vmatprep.subr.mxu0 0.0
        %600 = vmatpush1.msra.mxu0 0.0
        %601 = vmatprep.subr.mxu0 0.0
        %602 = vmatpush1.msra.mxu0 0.0
        %603 = vmatprep.subr.mxu0 0.0
        %604 = vmatpush1.msra.mxu0 0.0
        %605 = vmatprep.subr.mxu0 0.0
        %606 = vmatpush1.msra.mxu0 0.0
        %607 = vmatprep.subr.mxu0 0.0
        %608 = vmatpush1.msra.mxu0 0.0
        %609 = vmatprep.subr.mxu0 0.0
        %610 = vmatpush1.msra.mxu0 0.0
        %611 = vmatprep.subr.mxu0 0.0
        %612 = vmatpush1.msra.mxu0 0.0
        %613 = vmatprep.subr.mxu0 0.0
        %614 = vmatpush1.msra.mxu0 0.0
        %615 = vmatprep.subr.mxu0 0.0
        %616 = vmatpush1.msra.mxu0 0.0
        %617 = vmatprep.subr.mxu0 0.0
        %618 = vmatpush1.msra.mxu0 0.0
        %619 = vmatprep.subr.mxu0 0.0
        %620 = vmatpush1.msra.mxu0 0.0
        %621 = vmatprep.subr.mxu0 0.0
        %622 = vmatpush1.msra.mxu0 0.0
        %623 = vmatprep.subr.mxu0 0.0
        %624 = vmatpush1.msra.mxu0 0.0
        %625 = vmatprep.subr.mxu0 0.0
        %626 = vmatpush1.msra.mxu0 0.0
        %627 = vmatprep.subr.mxu0 0.0
        %628 = vmatpush1.msra.mxu0 0.0
        %629 = vmatprep.subr.mxu0 0.0
        %630 = vmatpush1.msra.mxu0 0.0
        %631 = vmatprep.subr.mxu0 0.0
        %632 = vmatpush1.msra.mxu0 0.0
        %633 = vmatprep.subr.mxu0 0.0
        %634 = vmatpush1.msra.mxu0 0.0
        %635 = vmatprep.subr.mxu0 0.0
        %636 = vmatpush1.msra.mxu0 0.0
        %637 = vmatprep.subr.mxu0 0.0
        %638 = vmatpush1.msra.mxu0 0.0
        %639 = vmatprep.subr.mxu0 0.0
        %640 = vmatpush1.msra.mxu0 0.0
        %641 = vmatprep.mubr.f32.mxu0 0.0
        %642 = vmatmul.mubr.f32.gmra.mrb[0].mxu0 %v526
        %v643 = vpop.f32.mrb[0].mxu0
        %v644 = vadd.f32 0.0, %v643
        %v645 = vpop.f32.mrb[0].mxu0
        %646 = vmatprep.mubr.f32.mxu0 0.0
        %647 = vmatmul.mubr.f32.gmra.mrb[0].mxu0 %v529
        %v648 = vpop.f32.mrb[0].mxu0
        %v649 = vadd.f32 0.0, %v648
        %v650 = vpop.f32.mrb[0].mxu0
        %651 = vmatprep.mubr.f32.mxu0 0.0
        %652 = vmatmul.mubr.f32.gmra.mrb[0].mxu0 %v532
        %v653 = vpop.f32.mrb[0].mxu0
        %v654 = vadd.f32 0.0, %v653
        %v655 = vpop.f32.mrb[0].mxu0
        %656 = vmatprep.mubr.f32.mxu0 0.0
        %657 = vmatmul.mubr.f32.gmra.mrb[0].mxu0 %v535
        %v658 = vpop.f32.mrb[0].mxu0
        %v659 = vadd.f32 0.0, %v658
        %v660 = vpop.f32.mrb[0].mxu0
        %661 = vmatprep.mubr.f32.mxu0 0.0
        %662 = vmatmul.mubr.f32.gmra.mrb[0].mxu0 %v538
        %v663 = vpop.f32.mrb[0].mxu0
        %v664 = vadd.f32 0.0, %v663
        %v665 = vpop.f32.mrb[0].mxu0
        %666 = vmatprep.mubr.f32.mxu0 0.0
        %667 = vmatmul.mubr.f32.gmra.mrb[0].mxu0 %v541
        %v668 = vpop.f32.mrb[0].mxu0
        %v669 = vadd.f32 0.0, %v668
        %v670 = vpop.f32.mrb[0].mxu0
        %671 = vmatprep.mubr.f32.mxu0 0.0
        %672 = vmatmul.mubr.f32.gmra.mrb[0].mxu0 %v544
        %v673 = vpop.f32.mrb[0].mxu0
        %v674 = vadd.f32 0.0, %v673
        %v675 = vpop.f32.mrb[0].mxu0
        %676 = vmatprep.mubr.f32.mxu0 0.0
        %677 = vmatmul.mubr.f32.gmra.mrb[0].mxu0 %v547
        %v678 = vpop.f32.mrb[0].mxu0
        %v679 = vadd.f32 0.0, %v678
        %v680 = vpop.f32.mrb[0].mxu0
        %681 = vmatprep.mubr.f32.mxu0 0.0
        %682 = vmatmul.mubr.f32.gmra.mrb[0].mxu0 %v550
        %v683 = vpop.f32.mrb[0].mxu0
        %v684 = vadd.f32 0.0, %v683
        %v685 = vpop.f32.mrb[0].mxu0
        %686 = vmatprep.mubr.f32.mxu0 0.0
        %687 = vmatmul.mubr.f32.gmra.mrb[0].mxu0 %v553
        %v688 = vpop.f32.mrb[0].mxu0
        %v689 = vadd.f32 0.0, %v688
        %v690 = vpop.f32.mrb[0].mxu0
        %691 = vmatprep.mubr.f32.mxu0 0.0
        %692 = vmatmul.mubr.f32.gmra.mrb[0].mxu0 %v556
        %v693 = vpop.f32.mrb[0].mxu0
        %v694 = vadd.f32 0.0, %v693
        %v695 = vpop.f32.mrb[0].mxu0
        %696 = vmatprep.mubr.f32.mxu0 0.0
        %697 = vmatmul.mubr.f32.gmra.mrb[0].mxu0 %v559
        %v698 = vpop.f32.mrb[0].mxu0
        %v699 = vadd.f32 0.0, %v698
        %v700 = vpop.f32.mrb[0].mxu0
        %701 = vmatprep.mubr.f32.mxu0 0.0
        %702 = vmatmul.mubr.f32.gmra.mrb[0].mxu0 %v562
        %v703 = vpop.f32.mrb[0].mxu0
        %v704 = vadd.f32 0.0, %v703
        %v705 = vpop.f32.mrb[0].mxu0
        %706 = vmatprep.mubr.f32.mxu0 0.0
        %707 = vmatmul.mubr.f32.gmra.mrb[0].mxu0 %v565
        %v708 = vpop.f32.mrb[0].mxu0
        %v709 = vadd.f32 0.0, %v708
        %v710 = vpop.f32.mrb[0].mxu0
        %711 = vmatprep.mubr.f32.mxu0 0.0
        %712 = vmatmul.mubr.f32.gmra.mrb[0].mxu0 %v568
        %v713 = vpop.f32.mrb[0].mxu0
        %v714 = vadd.f32 0.0, %v713
        %v715 = vpop.f32.mrb[0].mxu0
        %716 = vmatprep.mubr.f32.mxu0 0.0
        %717 = vmatmul.mubr.f32.gmra.mrb[0].mxu0 %v571
        %v718 = vpop.f32.mrb[0].mxu0
        %v719 = vadd.f32 0.0, %v718
        %v720 = vpop.f32.mrb[0].mxu0
        %721 = vdwg.mxu0
        %v722 = vmul.f32 %v644, %v461
        %v723 = vmul.f32 %v649, %v464
        %v724 = vmul.f32 %v654, %v469
        %v725 = vmul.f32 %v659, %v472
        %v726 = vmul.f32 %v664, %v477
        %v727 = vmul.f32 %v669, %v480
        %v728 = vmul.f32 %v674, %v485
        %v729 = vmul.f32 %v679, %v488
        %v730 = vmul.f32 %v684, %v493
        %v731 = vmul.f32 %v689, %v496
        %v732 = vmul.f32 %v694, %v501
        %v733 = vmul.f32 %v699, %v504
        %v734 = vmul.f32 %v704, %v509
        %v735 = vmul.f32 %v709, %v512
        %v736 = vmul.f32 %v714, %v517
        %v737 = vmul.f32 %v719, %v520
        %v738 = vld [vmem:[%s5] sm:$0xff]
        %v739 = vld [vmem:[%s5 + $0x8] sm:$0xff]
        %vm740 = vcmask 130048
        %v742 = vsel %vm740, %v722, 0
        %v745 = vsel %vm740, %v723, 0
        %v748 = vsel %vm740, %v724, 0
        %v751 = vsel %vm740, %v725, 0
        %v754 = vsel %vm740, %v726, 0
        %v757 = vsel %vm740, %v727, 0
        %v760 = vsel %vm740, %v728, 0
        %v763 = vsel %vm740, %v729, 0
        %v766 = vsel %vm740, %v730, 0
        %v769 = vsel %vm740, %v731, 0
        %v772 = vsel %vm740, %v732, 0
        %v775 = vsel %vm740, %v733, 0
        %v778 = vsel %vm740, %v734, 0
        %v781 = vsel %vm740, %v735, 0
        %v784 = vsel %vm740, %v736, 0
        %v787 = vsel %vm740, %v737, 0
        %789 = vmatprep.subr.mxu0 0.0
        %790 = vmatpush1.msra.mxu0 %v738
        %791 = vmatprep.subr.mxu0 0.0
        %792 = vmatpush1.msra.mxu0 %v739
        %793 = vmatprep.subr.mxu0 0.0
        %794 = vmatpush1.msra.mxu0 0.0
        %795 = vmatprep.subr.mxu0 0.0
        %796 = vmatpush1.msra.mxu0 0.0
        %797 = vmatprep.subr.mxu0 0.0
        %798 = vmatpush1.msra.mxu0 0.0
        %799 = vmatprep.subr.mxu0 0.0
        %800 = vmatpush1.msra.mxu0 0.0
        %801 = vmatprep.subr.mxu0 0.0
        %802 = vmatpush1.msra.mxu0 0.0
        %803 = vmatprep.subr.mxu0 0.0
        %804 = vmatpush1.msra.mxu0 0.0
        %805 = vmatprep.subr.mxu0 0.0
        %806 = vmatpush1.msra.mxu0 0.0
        %807 = vmatprep.subr.mxu0 0.0
        %808 = vmatpush1.msra.mxu0 0.0
        %809 = vmatprep.subr.mxu0 0.0
        %810 = vmatpush1.msra.mxu0 0.0
        %811 = vmatprep.subr.mxu0 0.0
        %812 = vmatpush1.msra.mxu0 0.0
        %813 = vmatprep.subr.mxu0 0.0
        %814 = vmatpush1.msra.mxu0 0.0
        %815 = vmatprep.subr.mxu0 0.0
        %816 = vmatpush1.msra.mxu0 0.0
        %817 = vmatprep.subr.mxu0 0.0
        %818 = vmatpush1.msra.mxu0 0.0
        %819 = vmatprep.subr.mxu0 0.0
        %820 = vmatpush1.msra.mxu0 0.0
        %821 = vmatprep.subr.mxu0 0.0
        %822 = vmatpush1.msra.mxu0 0.0
        %823 = vmatprep.subr.mxu0 0.0
        %824 = vmatpush1.msra.mxu0 0.0
        %825 = vmatprep.subr.mxu0 0.0
        %826 = vmatpush1.msra.mxu0 0.0
        %827 = vmatprep.subr.mxu0 0.0
        %828 = vmatpush1.msra.mxu0 0.0
        %829 = vmatprep.subr.mxu0 0.0
        %830 = vmatpush1.msra.mxu0 0.0
        %831 = vmatprep.subr.mxu0 0.0
        %832 = vmatpush1.msra.mxu0 0.0
        %833 = vmatprep.subr.mxu0 0.0
        %834 = vmatpush1.msra.mxu0 0.0
        %835 = vmatprep.subr.mxu0 0.0
        %836 = vmatpush1.msra.mxu0 0.0
        %837 = vmatprep.subr.mxu0 0.0
        %838 = vmatpush1.msra.mxu0 0.0
        %839 = vmatprep.subr.mxu0 0.0
        %840 = vmatpush1.msra.mxu0 0.0
        %841 = vmatprep.subr.mxu0 0.0
        %842 = vmatpush1.msra.mxu0 0.0
        %843 = vmatprep.subr.mxu0 0.0
        %844 = vmatpush1.msra.mxu0 0.0
        %845 = vmatprep.subr.mxu0 0.0
        %846 = vmatpush1.msra.mxu0 0.0
        %847 = vmatprep.subr.mxu0 0.0
        %848 = vmatpush1.msra.mxu0 0.0
        %849 = vmatprep.subr.mxu0 0.0
        %850 = vmatpush1.msra.mxu0 0.0
        %851 = vmatprep.subr.mxu0 0.0
        %852 = vmatpush1.msra.mxu0 0.0
        %853 = vmatprep.mubr.f32.mxu0 0.0
        %854 = vmatmul.mubr.f32.gmra.mrb[0].mxu0 %v742
        %v855 = vpop.f32.mrb[0].mxu0
        %v856 = vadd.f32 0.0, %v855
        %v857 = vpop.f32.mrb[0].mxu0
        %858 = vmatprep.mubr.f32.mxu0 0.0
        %859 = vmatmul.mubr.f32.gmra.mrb[0].mxu0 %v745
        %v860 = vpop.f32.mrb[0].mxu0
        %v861 = vadd.f32 0.0, %v860
        %v862 = vpop.f32.mrb[0].mxu0
        %863 = vmatprep.mubr.f32.mxu0 0.0
        %864 = vmatmul.mubr.f32.gmra.mrb[0].mxu0 %v748
        %v865 = vpop.f32.mrb[0].mxu0
        %v866 = vadd.f32 0.0, %v865
        %v867 = vpop.f32.mrb[0].mxu0
        %868 = vmatprep.mubr.f32.mxu0 0.0
        %869 = vmatmul.mubr.f32.gmra.mrb[0].mxu0 %v751
        %v870 = vpop.f32.mrb[0].mxu0
        %v871 = vadd.f32 0.0, %v870
        %v872 = vpop.f32.mrb[0].mxu0
        %873 = vmatprep.mubr.f32.mxu0 0.0
        %874 = vmatmul.mubr.f32.gmra.mrb[0].mxu0 %v754
        %v875 = vpop.f32.mrb[0].mxu0
        %v876 = vadd.f32 0.0, %v875
        %v877 = vpop.f32.mrb[0].mxu0
        %878 = vmatprep.mubr.f32.mxu0 0.0
        %879 = vmatmul.mubr.f32.gmra.mrb[0].mxu0 %v757
        %v880 = vpop.f32.mrb[0].mxu0
        %v881 = vadd.f32 0.0, %v880
        %v882 = vpop.f32.mrb[0].mxu0
        %883 = vmatprep.mubr.f32.mxu0 0.0
        %884 = vmatmul.mubr.f32.gmra.mrb[0].mxu0 %v760
        %v885 = vpop.f32.mrb[0].mxu0
        %v886 = vadd.f32 0.0, %v885
        %v887 = vpop.f32.mrb[0].mxu0
        %888 = vmatprep.mubr.f32.mxu0 0.0
        %889 = vmatmul.mubr.f32.gmra.mrb[0].mxu0 %v763
        %v890 = vpop.f32.mrb[0].mxu0
        %v891 = vadd.f32 0.0, %v890
        %v892 = vpop.f32.mrb[0].mxu0
        %893 = vmatprep.mubr.f32.mxu0 0.0
        %894 = vmatmul.mubr.f32.gmra.mrb[0].mxu0 %v766
        %v895 = vpop.f32.mrb[0].mxu0
        %v896 = vadd.f32 0.0, %v895
        %v897 = vpop.f32.mrb[0].mxu0
        %898 = vmatprep.mubr.f32.mxu0 0.0
        %899 = vmatmul.mubr.f32.gmra.mrb[0].mxu0 %v769
        %v900 = vpop.f32.mrb[0].mxu0
        %v901 = vadd.f32 0.0, %v900
        %v902 = vpop.f32.mrb[0].mxu0
        %903 = vmatprep.mubr.f32.mxu0 0.0
        %904 = vmatmul.mubr.f32.gmra.mrb[0].mxu0 %v772
        %v905 = vpop.f32.mrb[0].mxu0
        %v906 = vadd.f32 0.0, %v905
        %v907 = vpop.f32.mrb[0].mxu0
        %908 = vmatprep.mubr.f32.mxu0 0.0
        %909 = vmatmul.mubr.f32.gmra.mrb[0].mxu0 %v775
        %v910 = vpop.f32.mrb[0].mxu0
        %v911 = vadd.f32 0.0, %v910
        %v912 = vpop.f32.mrb[0].mxu0
        %913 = vmatprep.mubr.f32.mxu0 0.0
        %914 = vmatmul.mubr.f32.gmra.mrb[0].mxu0 %v778
        %v915 = vpop.f32.mrb[0].mxu0
        %v916 = vadd.f32 0.0, %v915
        %v917 = vpop.f32.mrb[0].mxu0
        %918 = vmatprep.mubr.f32.mxu0 0.0
        %919 = vmatmul.mubr.f32.gmra.mrb[0].mxu0 %v781
        %v920 = vpop.f32.mrb[0].mxu0
        %v921 = vadd.f32 0.0, %v920
        %v922 = vpop.f32.mrb[0].mxu0
        %923 = vmatprep.mubr.f32.mxu0 0.0
        %924 = vmatmul.mubr.f32.gmra.mrb[0].mxu0 %v784
        %v925 = vpop.f32.mrb[0].mxu0
        %v926 = vadd.f32 0.0, %v925
        %v927 = vpop.f32.mrb[0].mxu0
        %928 = vmatprep.mubr.f32.mxu0 0.0
        %929 = vmatmul.mubr.f32.gmra.mrb[0].mxu0 %v787
        %v930 = vpop.f32.mrb[0].mxu0
        %v931 = vadd.f32 0.0, %v930
        %v932 = vpop.f32.mrb[0].mxu0
        %933 = vdwg.mxu0
        %v934 = vmul.f32 %v644, %v856
        %v935 = vmul.f32 %v649, %v861
        %v936 = vmul.f32 %v654, %v866
        %v937 = vmul.f32 %v659, %v871
        %v938 = vmul.f32 %v664, %v876
        %v939 = vmul.f32 %v669, %v881
        %v940 = vmul.f32 %v674, %v886
        %v941 = vmul.f32 %v679, %v891
        %v942 = vmul.f32 %v684, %v896
        %v943 = vmul.f32 %v689, %v901
        %v944 = vmul.f32 %v694, %v906
        %v945 = vmul.f32 %v699, %v911
        %v946 = vmul.f32 %v704, %v916
        %v947 = vmul.f32 %v709, %v921
        %v948 = vmul.f32 %v714, %v926
        %v949 = vmul.f32 %v719, %v931
        %v950 = vunpack.c.l.bf16 %v313
        %v951 = vunpack.c.l.bf16 %v314
        %v952 = vunpack.c.l.bf16 %v315
        %v953 = vunpack.c.l.bf16 %v316
        %v954 = vunpack.c.l.bf16 %v317
        %v955 = vunpack.c.l.bf16 %v318
        %v956 = vunpack.c.l.bf16 %v319
        %v957 = vunpack.c.l.bf16 %v320
        %v958 = vunpack.c.l.bf16 %v321
        %v959 = vunpack.c.l.bf16 %v322
        %v960 = vunpack.c.l.bf16 %v323
        %v961 = vunpack.c.l.bf16 %v324
        %v962 = vunpack.c.l.bf16 %v325
        %v963 = vunpack.c.l.bf16 %v326
        %v964 = vunpack.c.l.bf16 %v327
        %v965 = vunpack.c.l.bf16 %v328
        %v966 = vpack.c.bf16 %v935, %v934
        %v967 = vpack.c.bf16 %v937, %v936
        %v968 = vpack.c.bf16 %v939, %v938
        %v969 = vpack.c.bf16 %v941, %v940
        %v970 = vpack.c.bf16 %v943, %v942
        %v971 = vpack.c.bf16 %v945, %v944
        %v972 = vpack.c.bf16 %v947, %v946
        %v973 = vpack.c.bf16 %v949, %v948
        %v974 = vld [vmem:[%s3] sm:$0xf]
        %v975 = vld [vmem:[%s3 + $0x4] sm:$0xf]
        %v978 = vunpack.c.l.b16 %v974
        %v979 = vunpack.c.l.b16 %v975
        %v980 = vpack.c.b16 %v979, %v978
        %v983 = vsel %vm740, %v966, 0
        %v986 = vsel %vm740, %v967, 0
        %v989 = vsel %vm740, %v968, 0
        %v992 = vsel %vm740, %v969, 0
        %v995 = vsel %vm740, %v970, 0
        %v998 = vsel %vm740, %v971, 0
        %v1001 = vsel %vm740, %v972, 0
        %v1004 = vsel %vm740, %v973, 0
        %1006 = vmatprep.subr.bf16.mxu0 0
        %1007 = vmatpush1.bf16.msra.mxu0 %v980
        %1008 = vmatprep.subr.bf16.mxu0 0
        %1009 = vmatpush1.bf16.msra.mxu0 0
        %1010 = vmatprep.subr.bf16.mxu0 0
        %1011 = vmatpush1.bf16.msra.mxu0 0
        %1012 = vmatprep.subr.bf16.mxu0 0
        %1013 = vmatpush1.bf16.msra.mxu0 0
        %1014 = vmatprep.subr.bf16.mxu0 0
        %1015 = vmatpush1.bf16.msra.mxu0 0
        %1016 = vmatprep.subr.bf16.mxu0 0
        %1017 = vmatpush1.bf16.msra.mxu0 0
        %1018 = vmatprep.subr.bf16.mxu0 0
        %1019 = vmatpush1.bf16.msra.mxu0 0
        %1020 = vmatprep.subr.bf16.mxu0 0
        %1021 = vmatpush1.bf16.msra.mxu0 0
        %1022 = vmatprep.subr.bf16.mxu0 0
        %1023 = vmatpush1.bf16.msra.mxu0 0
        %1024 = vmatprep.subr.bf16.mxu0 0
        %1025 = vmatpush1.bf16.msra.mxu0 0
        %1026 = vmatprep.subr.bf16.mxu0 0
        %1027 = vmatpush1.bf16.msra.mxu0 0
        %1028 = vmatprep.subr.bf16.mxu0 0
        %1029 = vmatpush1.bf16.msra.mxu0 0
        %1030 = vmatprep.subr.bf16.mxu0 0
        %1031 = vmatpush1.bf16.msra.mxu0 0
        %1032 = vmatprep.subr.bf16.mxu0 0
        %1033 = vmatpush1.bf16.msra.mxu0 0
        %1034 = vmatprep.subr.bf16.mxu0 0
        %1035 = vmatpush1.bf16.msra.mxu0 0
        %1036 = vmatprep.subr.bf16.mxu0 0
        %1037 = vmatpush1.bf16.msra.mxu0 0
        %1038 = vmatprep.mubr.bf16.mxu0 0
        %1039 = vmatmul.mubr.bf16.gmra.mrb[0].mxu0 %v983
        %v1040 = vpop.f32.mrb[0].mxu0
        %v1041 = vadd.f32 0.0, %v1040
        %v1042 = vpop.f32.mrb[0].mxu0
        %v1043 = vpop.f32.mrb[0].mxu0
        %v1044 = vadd.f32 0.0, %v1043
        %v1045 = vpop.f32.mrb[0].mxu0
        %1046 = vmatprep.mubr.bf16.mxu0 0
        %1047 = vmatmul.mubr.bf16.gmra.mrb[0].mxu0 %v986
        %v1048 = vpop.f32.mrb[0].mxu0
        %v1049 = vadd.f32 0.0, %v1048
        %v1050 = vpop.f32.mrb[0].mxu0
        %v1051 = vpop.f32.mrb[0].mxu0
        %v1052 = vadd.f32 0.0, %v1051
        %v1053 = vpop.f32.mrb[0].mxu0
        %1054 = vmatprep.mubr.bf16.mxu0 0
        %1055 = vmatmul.mubr.bf16.gmra.mrb[0].mxu0 %v989
        %v1056 = vpop.f32.mrb[0].mxu0
        %v1057 = vadd.f32 0.0, %v1056
        %v1058 = vpop.f32.mrb[0].mxu0
        %v1059 = vpop.f32.mrb[0].mxu0
        %v1060 = vadd.f32 0.0, %v1059
        %v1061 = vpop.f32.mrb[0].mxu0
        %1062 = vmatprep.mubr.bf16.mxu0 0
        %1063 = vmatmul.mubr.bf16.gmra.mrb[0].mxu0 %v992
        %v1064 = vpop.f32.mrb[0].mxu0
        %v1065 = vadd.f32 0.0, %v1064
        %v1066 = vpop.f32.mrb[0].mxu0
        %v1067 = vpop.f32.mrb[0].mxu0
        %v1068 = vadd.f32 0.0, %v1067
        %v1069 = vpop.f32.mrb[0].mxu0
        %1070 = vmatprep.mubr.bf16.mxu0 0
        %1071 = vmatmul.mubr.bf16.gmra.mrb[0].mxu0 %v995
        %v1072 = vpop.f32.mrb[0].mxu0
        %v1073 = vadd.f32 0.0, %v1072
        %v1074 = vpop.f32.mrb[0].mxu0
        %v1075 = vpop.f32.mrb[0].mxu0
        %v1076 = vadd.f32 0.0, %v1075
        %v1077 = vpop.f32.mrb[0].mxu0
        %1078 = vmatprep.mubr.bf16.mxu0 0
        %1079 = vmatmul.mubr.bf16.gmra.mrb[0].mxu0 %v998
        %v1080 = vpop.f32.mrb[0].mxu0
        %v1081 = vadd.f32 0.0, %v1080
        %v1082 = vpop.f32.mrb[0].mxu0
        %v1083 = vpop.f32.mrb[0].mxu0
        %v1084 = vadd.f32 0.0, %v1083
        %v1085 = vpop.f32.mrb[0].mxu0
        %1086 = vmatprep.mubr.bf16.mxu0 0
        %1087 = vmatmul.mubr.bf16.gmra.mrb[0].mxu0 %v1001
        %v1088 = vpop.f32.mrb[0].mxu0
        %v1089 = vadd.f32 0.0, %v1088
        %v1090 = vpop.f32.mrb[0].mxu0
        %v1091 = vpop.f32.mrb[0].mxu0
        %v1092 = vadd.f32 0.0, %v1091
        %v1093 = vpop.f32.mrb[0].mxu0
        %1094 = vmatprep.mubr.bf16.mxu0 0
        %1095 = vmatmul.mubr.bf16.gmra.mrb[0].mxu0 %v1004
        %v1096 = vpop.f32.mrb[0].mxu0
        %v1097 = vadd.f32 0.0, %v1096
        %v1098 = vpop.f32.mrb[0].mxu0
        %v1099 = vpop.f32.mrb[0].mxu0
        %v1100 = vadd.f32 0.0, %v1099
        %v1101 = vpop.f32.mrb[0].mxu0
        %1102 = vdwg.mxu0
        %v1103 = vadd.f32 %v950, %v1041
        %v1104 = vadd.f32 %v951, %v1044
        %v1105 = vadd.f32 %v952, %v1049
        %v1106 = vadd.f32 %v953, %v1052
        %v1107 = vadd.f32 %v954, %v1057
        %v1108 = vadd.f32 %v955, %v1060
        %v1109 = vadd.f32 %v956, %v1065
        %v1110 = vadd.f32 %v957, %v1068
        %v1111 = vadd.f32 %v958, %v1073
        %v1112 = vadd.f32 %v959, %v1076
        %v1113 = vadd.f32 %v960, %v1081
        %v1114 = vadd.f32 %v961, %v1084
        %v1115 = vadd.f32 %v962, %v1089
        %v1116 = vadd.f32 %v963, %v1092
        %v1117 = vadd.f32 %v964, %v1097
        %v1118 = vadd.f32 %v965, %v1100
        %1119 = vxpose.xlu0.b32.start [1/16] %v1103, 128
        %1120 = vxpose.xlu0.b32.cont [2/16] %v1104, 128
        %1121 = vxpose.xlu0.b32.cont [3/16] %v1105, 128
        %1122 = vxpose.xlu0.b32.cont [4/16] %v1106, 128
        %1123 = vxpose.xlu0.b32.cont [5/16] %v1107, 128
        %1124 = vxpose.xlu0.b32.cont [6/16] %v1108, 128
        %1125 = vxpose.xlu0.b32.cont [7/16] %v1109, 128
        %1126 = vxpose.xlu0.b32.cont [8/16] %v1110, 128
        %1127 = vxpose.xlu0.b32.cont [9/16] %v1111, 128
        %1128 = vxpose.xlu0.b32.cont [10/16] %v1112, 128
        %1129 = vxpose.xlu0.b32.cont [11/16] %v1113, 128
        %1130 = vxpose.xlu0.b32.cont [12/16] %v1114, 128
        %1131 = vxpose.xlu0.b32.cont [13/16] %v1115, 128
        %1132 = vxpose.xlu0.b32.cont [14/16] %v1116, 128
        %1133 = vxpose.xlu0.b32.cont [15/16] %v1117, 128
        %1134 = vxpose.xlu0.b32.end [16/16] %v1118, 128
        %v1135 = vpop.trf.xlu0
        %v1136 = vpop.trf.xlu0
        %v1137 = vpop.trf.xlu0
        %v1138 = vpop.trf.xlu0
        %v1139 = vpop.trf.xlu0
        %v1140 = vpop.trf.xlu0
        %v1141 = vpop.trf.xlu0
        %v1142 = vpop.trf.xlu0
        %v1143 = vpop.trf.xlu0
        %v1144 = vpop.trf.xlu0
        %v1145 = vpop.trf.xlu0
        %v1146 = vpop.trf.xlu0
        %v1147 = vpop.trf.xlu0
        %v1148 = vpop.trf.xlu0
        %v1149 = vpop.trf.xlu0
        %v1150 = vpop.trf.xlu0
        %v1151 = vpack.c.bf16 %v1136, %v1135
        %v1152 = vpack.c.bf16 %v1138, %v1137
        %v1155 = vunpack.c.l.b16 %v1151
        %v1156 = vunpack.c.h.b16 %v1151
        %v1157 = vunpack.c.l.b16 %v1152
        %v1158 = vunpack.c.h.b16 %v1152
        %v1159 = vpack.c.b16 %v1155, %v1155
        %v1160 = vpack.c.b16 %v1156, %v1156
        %v1161 = vpack.c.b16 %v1157, %v1157
        %v1162 = vpack.c.b16 %v1158, %v1158
        %1167 = vst [vmem:[%s291] sm:$0xf] %v1159
        %1168 = vst [vmem:[%s291 + $0x4] sm:$0xf] %v1160
        %1169 = vst [vmem:[%s291 + $0x8] sm:$0xf] %v1161
        %1170 = vst [vmem:[%s291 + $0xc] sm:$0xf] %v1162
        %s1171 = sand.u32 %s179, 1
        %s1172 = sand.u32 %s179, 1
        %s1173 = smul.addr %s1172, 16
        %s1174 = scalar_lea.vmem [#allocation2], %s1173
        // Predicated region
        $region45: #{scab_upsample_forward.3} parent=43 // pred_check
          %p1175 = pneg %p189
        $region46: #{scab_upsample_forward.3} parent=43 // pred_check_branch
          %1177 = sbr.rel (%p1175) target = $region48
        $region47: #{scab_upsample_forward.3} parent=43 // pred_region
          %s1178 = smul.addr %s22, 8
          %s1179 = sadd.s32 %s21, %s1178
          %s1180 = smul.addr %s1179, 4
          %s1181 = scalar_lea.vmem %s6, %s1180
          // Predicated region
          $region49: #{scab_upsample_forward.3} parent=47 // pred_check
            _
          $region50: #{scab_upsample_forward.3} parent=47 // pred_check_branch
            %1183 = sbr.rel (0) target = $region52
          $region51: #{scab_upsample_forward.3} parent=47 // pred_region
            // Predicated region
            $region53: #{scab_upsample_forward.3} parent=51 // pred_check
              _
            $region54: #{scab_upsample_forward.3} parent=51 // pred_check_branch
              %1185 = sbr.rel target = $region56
            $region55: #{scab_upsample_forward.3} parent=51 // pred_region
              // Predicated region
              $region68: #{scab_upsample_forward.3} parent=55 // pred_check
                _
              $region69: #{scab_upsample_forward.3} parent=55 // pred_check_branch
                %1206 = sbr.rel (0) target = $region71
              $region70: #{scab_upsample_forward.3} parent=55 // pred_region
                loop: start=0, step=1, limit=1
                $region72: #{scab_upsample_forward.3} parent=70 // loop_pre_header
                  _
                $region73: #{scab_upsample_forward.3} parent=70 // loop_header
                  %s1208 = sphi 0, %s1212
                  %p1209 = scmp.ge.s32.totalorder %s1208, 1
                  %s1213 = sphi %s1174, %s1174
                  %s1214 = sphi %s1181, %s1181
                $region74: #{scab_upsample_forward.3} parent=70 // loop_header_branch
                  %1211 = sbr.rel (%p1209) target = $region78
                $region75: #{scab_upsample_forward.3} parent=70 // loop_body
                  _
                $region76: #{scab_upsample_forward.3} parent=70 // loop_footer
                  %s1212 = sadd.s32 1, %s1208
                $region77: #{scab_upsample_forward.3} parent=70 // loop_footer_branch
                  %1207 = sbr.rel target = $region73
                $region78: #{scab_upsample_forward.3} parent=70 // loop_exit
                  _
                loop: start=0, step=1, limit=1
                $region79: #{scab_upsample_forward.3} parent=70 // loop_pre_header
                  _
                $region80: #{scab_upsample_forward.3} parent=70 // loop_header
                  %s1217 = sphi 0, %s1221
                  %p1218 = scmp.ge.s32.totalorder %s1217, 1
                  %s1222 = sphi %s1174, %s1174
                  %s1223 = sphi %s1181, %s1181
                $region81: #{scab_upsample_forward.3} parent=70 // loop_header_branch
                  %1220 = sbr.rel (%p1218) target = $region85
                $region82: #{scab_upsample_forward.3} parent=70 // loop_body
                  %v1224 = vld [vmem:[%s1222] sm:$0xf]
                  %1225 = vst [vmem:[%s1223] sm:$0xf] %v1224
                  %v1226 = vld [vmem:[%s1222 + $0x4] sm:$0xf]
                  %1227 = vst [vmem:[%s1223 + $0x8] sm:$0xf] %v1226
                  %v1228 = vld [vmem:[%s1222 + $0x8] sm:$0xf]
                  %1229 = vst [vmem:[%s1223 + $0x10] sm:$0xf] %v1228
                  %v1230 = vld [vmem:[%s1222 + $0xc] sm:$0xf]
                  %1231 = vst [vmem:[%s1223 + $0x18] sm:$0xf] %v1230
                $region83: #{scab_upsample_forward.3} parent=70 // loop_footer
                  %s1221 = sadd.s32 1, %s1217
                $region84: #{scab_upsample_forward.3} parent=70 // loop_footer_branch
                  %1216 = sbr.rel target = $region80
                $region85: #{scab_upsample_forward.3} parent=70 // loop_exit
                  _
              $region71: #{scab_upsample_forward.3} parent=55 // pred_fallthru
                _
            $region56: #{scab_upsample_forward.3} parent=51 // pred_fallthru
              _
            // Predicated region
            $region57: #{scab_upsample_forward.3} parent=51 // pred_check
              _
            $region58: #{scab_upsample_forward.3} parent=51 // pred_check_branch
              %1187 = sbr.rel (0) target = $region60
            $region59: #{scab_upsample_forward.3} parent=51 // pred_region
              loop: start=0, step=1, limit=1
              $region61: #{scab_upsample_forward.3} parent=59 // loop_pre_header
                _
              $region62: #{scab_upsample_forward.3} parent=59 // loop_header
                %s1190 = sphi 0, %s1194
                %p1191 = scmp.ge.s32.totalorder %s1190, 1
                %s1195 = sphi %s1174, %s1174
                %s1196 = sphi %s1181, %s1181
              $region63: #{scab_upsample_forward.3} parent=59 // loop_header_branch
                %1193 = sbr.rel (%p1191) target = $region67
              $region64: #{scab_upsample_forward.3} parent=59 // loop_body
                %v1197 = vld [vmem:[%s1195] sm:$0xf]
                %1198 = vst [vmem:[%s1196] sm:$0xf] %v1197
                %v1199 = vld [vmem:[%s1195 + $0x4] sm:$0xf]
                %1200 = vst [vmem:[%s1196 + $0x8] sm:$0xf] %v1199
                %v1201 = vld [vmem:[%s1195 + $0x8] sm:$0xf]
                %1202 = vst [vmem:[%s1196 + $0x10] sm:$0xf] %v1201
                %v1203 = vld [vmem:[%s1195 + $0xc] sm:$0xf]
                %1204 = vst [vmem:[%s1196 + $0x18] sm:$0xf] %v1203
              $region65: #{scab_upsample_forward.3} parent=59 // loop_footer
                %s1194 = sadd.s32 1, %s1190
              $region66: #{scab_upsample_forward.3} parent=59 // loop_footer_branch
                %1189 = sbr.rel target = $region62
              $region67: #{scab_upsample_forward.3} parent=59 // loop_exit
                _
            $region60: #{scab_upsample_forward.3} parent=51 // pred_fallthru
              _
          $region52: #{scab_upsample_forward.3} parent=47 // pred_fallthru
            _
          %1232 = vnop
        $region48: #{scab_upsample_forward.3} parent=43 // pred_fallthru
          _
      $region44: #{scab_upsample_forward.3} parent=5 // pred_fallthru
        _
      %p1233 = scmp.le.s32.totalorder 2, %s12
      // Predicated region
      $region86: #{scab_upsample_forward.3} parent=5 // pred_check
        %p1234 = pneg %p1233
      $region87: #{scab_upsample_forward.3} parent=5 // pred_check_branch
        %1236 = sbr.rel (%p1234) target = $region89
      $region88: #{scab_upsample_forward.3} parent=5 // pred_region
        %s1237 = ssub.s32 %s12, 2
        // Predicated region
        $region90: #{scab_upsample_forward.3} parent=88 // pred_check
          %p1238 = pneg %p195
        $region91: #{scab_upsample_forward.3} parent=88 // pred_check_branch
          %1240 = sbr.rel (%p1238) target = $region93
        $region92: #{scab_upsample_forward.3} parent=88 // pred_region
          %s1241 = sand.u32 %s180, 1
          %s1242 = sand.u32 %s180, 1
          %s1243 = smul.addr %s1242, 16
          %s1244 = scalar_lea.vmem [#allocation2], %s1243
        $region93: #{scab_upsample_forward.3} parent=88 // pred_fallthru
          _
      $region89: #{scab_upsample_forward.3} parent=5 // pred_fallthru
        _
    $region6: #{scab_upsample_forward.3} parent=1 // loop_footer
      %s16 = sadd.s32 1, %s12
    $region7: #{scab_upsample_forward.3} parent=1 // loop_footer_branch
      %11 = sbr.rel target = $region3
    $region8: #{scab_upsample_forward.3} parent=1 // loop_exit
      _

</llo_original>
